<compile_context>
chip_gen: v5e
topology: v5e:2x2
jax: 0.10.0
libtpu: 0.0.40
codegen_flags: <defaults>
</compile_context>

<pallas_src>
import math

import jax
import jax.numpy as jnp
from jax.experimental import pallas as pl
from jax.experimental.pallas import tpu as pltpu

# ---- hyper-parameters (args.aemb, args.speaker_head_num, args.proj_hidden) ----
D_K = 16          # d_k == d_v == args.aemb
D_V = 16
N_HEADS = 4       # args.speaker_head_num
D_FF = 64         # args.proj_hidden
LN_EPS = 1e-5
NEG_INF = -1e9


def _layer_norm(x):
    mu = jnp.mean(x, axis=-1, keepdims=True)
    var = jnp.mean((x - mu) ** 2, axis=-1, keepdims=True)
    return (x - mu) * jax.lax.rsqrt(var + LN_EPS)


def _dot(a, b):
    return jnp.dot(a, b, preferred_element_type=jnp.float32)


def _dot_nt(a, b):  # a @ b.T without materializing the transpose
    return jax.lax.dot_general(a, b, (((1,), (1,)), ((), ())),
                               preferred_element_type=jnp.float32)


def _mha(q_in, kv_in, wq, wk, wv, wo, add_mask, attn_ref):
    """Multi-head attention over the batch-flattened sequence.

    q_in: (Nq, Dq), kv_in: (Nk, Dk); add_mask: (Nq, Nk) additive float mask
    (-1e9 at masked / cross-batch positions, 0 elsewhere).
    Writes per-head attention probs (full Nq x Nk) into attn_ref[h].
    Returns LN(residual + sum_h ctx_h @ wo_h).
    """
    scale = 1.0 / math.sqrt(D_K)
    # Fused projections: one matmul each instead of one per head.
    q = _dot(q_in, wq)       # (Nq, H*dk)
    k = _dot(kv_in, wk)      # (Nk, H*dk)
    v = _dot(kv_in, wv)      # (Nk, H*dv)

    acc = q_in               # residual; per-head output projection accumulates here
    for h in range(N_HEADS):
        qh = q[:, h * D_K:(h + 1) * D_K]
        kh = k[:, h * D_K:(h + 1) * D_K]
        vh = v[:, h * D_V:(h + 1) * D_V]
        scores = _dot_nt(qh, kh) * scale + add_mask
        m = jnp.max(scores, axis=-1, keepdims=True)
        e = jnp.exp(scores - m)
        denom = jnp.sum(e, axis=-1, keepdims=True)
        attn = e * pl.reciprocal(denom, approx=False)
        attn_ref[h] = attn                       # one wide store per head
        ctx = _dot(attn, vh)                     # (Nq, dv)
        acc = acc + _dot(ctx, wo[h * D_V:(h + 1) * D_V, :])
    return _layer_norm(acc)


def decoder_layer_kernel(dec_ref, enc_ref, smask_ref, xmask_ref,
                         wq1_ref, wk1_ref, wv1_ref, wo1_ref,
                         wq2_ref, wk2_ref, wv2_ref, wo2_ref,
                         w1_ref, w2_ref,
                         out_ref, sattn_ref, eattn_ref):
    dec = dec_ref[...]       # (B*Lq, Dq)
    enc = enc_ref[...]       # (B*Lk, Dk)

    # --- decoder self attention (masked, block-diagonal over batch) ---
    x = _mha(dec, dec,
             wq1_ref[...], wk1_ref[...], wv1_ref[...], wo1_ref[...],
             smask_ref[...], sattn_ref)

    # --- decoder-encoder cross attention (block-diagonal over batch only) ---
    x = _mha(x, enc,
             wq2_ref[...], wk2_ref[...], wv2_ref[...], wo2_ref[...],
             xmask_ref[...], eattn_ref)

    # --- position-wise feed forward ---
    hid = jnp.maximum(_dot(x, w1_ref[...]), 0.0)
    ffn = _dot(hid, w2_ref[...])
    out_ref[...] = _layer_norm(ffn + x)


def decoder_layer(dec_inputs, enc_outputs, self_mask, params):
    B, Lq, Dq = dec_inputs.shape
    _, Lk, Dk = enc_outputs.shape
    BLq, BLk = B * Lq, B * Lk

    dec_flat = dec_inputs.reshape(BLq, Dq)
    enc_flat = enc_outputs.reshape(BLk, Dk)

    # Block-diagonal additive masks in the batch-collapsed layout.
    q_idx = jnp.arange(BLq)
    bq, pq = q_idx // Lq, q_idx % Lq
    k_idx = jnp.arange(BLk)
    bk = k_idx // Lk
    same_self = bq[:, None] == bq[None, :]
    mask_vals = self_mask[bq[:, None], pq[:, None], pq[None, :]]      # (BLq, BLq)
    add_self = jnp.where(jnp.logical_or(jnp.logical_not(same_self), mask_vals > 0.5),
                         NEG_INF, 0.0).astype(jnp.float32)
    add_cross = jnp.where(bq[:, None] != bk[None, :],
                          NEG_INF, 0.0).astype(jnp.float32)

    args = (dec_flat, enc_flat, add_self, add_cross,
            params["wq1"], params["wk1"], params["wv1"], params["wo1"],
            params["wq2"], params["wk2"], params["wv2"], params["wo2"],
            params["w1"], params["w2"])

    def full_spec(a):
        nd = a.ndim
        return pl.BlockSpec(a.shape, lambda i, nd=nd: (0,) * nd)

    out_shape = [
        jax.ShapeDtypeStruct((BLq, Dq), jnp.float32),
        jax.ShapeDtypeStruct((N_HEADS, BLq, BLq), jnp.float32),
        jax.ShapeDtypeStruct((N_HEADS, BLq, BLk), jnp.float32),
    ]
    out_specs = [
        pl.BlockSpec((BLq, Dq), lambda i: (0, 0)),
        pl.BlockSpec((N_HEADS, BLq, BLq), lambda i: (0, 0, 0)),
        pl.BlockSpec((N_HEADS, BLq, BLk), lambda i: (0, 0, 0)),
    ]

    out_flat, sattn_full, eattn_full = pl.pallas_call(
        decoder_layer_kernel,
        out_shape=out_shape,
        grid_spec=pltpu.PrefetchScalarGridSpec(
            num_scalar_prefetch=0,
            grid=(1,),                       # whole problem in one grid step
            in_specs=[full_spec(a) for a in args],
            out_specs=out_specs,
        ),
        compiler_params=pltpu.CompilerParams(
            dimension_semantics=("arbitrary",)),
    )(*args)

    dec_out = out_flat.reshape(B, Lq, Dq)
    # Extract per-batch diagonal blocks of the collapsed attention maps.
    sattn = jnp.stack(
        [sattn_full[:, b * Lq:(b + 1) * Lq, b * Lq:(b + 1) * Lq] for b in range(B)],
        axis=0)                                    # (B, H, Lq, Lq)
    eattn = jnp.stack(
        [eattn_full[:, b * Lq:(b + 1) * Lq, b * Lk:(b + 1) * Lk] for b in range(B)],
        axis=0)                                    # (B, H, Lq, Lk)
    return dec_out, sattn, eattn


# ---------------------- pure-JAX reference (for verification) ----------------------
def _mha_ref(q_in, kv_in, wq, wk, wv, wo, mask):
    B, Lq, _ = q_in.shape
    Lkv = kv_in.shape[1]
    Q = (q_in @ wq).reshape(B, Lq, N_HEADS, D_K).transpose(0, 2, 1, 3)
    K = (kv_in @ wk).reshape(B, Lkv, N_HEADS, D_K).transpose(0, 2, 1, 3)
    V = (kv_in @ wv).reshape(B, Lkv, N_HEADS, D_V).transpose(0, 2, 1, 3)
    scores = jnp.einsum("bhqd,bhkd->bhqk", Q, K) / jnp.sqrt(jnp.float32(D_K))
    if mask is not None:
        scores = jnp.where(mask[:, None] > 0.5, -1e9, scores)
    attn = jax.nn.softmax(scores, axis=-1)
    ctx = jnp.einsum("bhqk,bhkd->bhqd", attn, V).transpose(0, 2, 1, 3).reshape(
        B, Lq, N_HEADS * D_V)
    out = ctx @ wo
    return _layer_norm(out + q_in), attn


def decoder_layer_ref(dec, enc, mask, p):
    x, sattn = _mha_ref(dec, dec, p["wq1"], p["wk1"], p["wv1"], p["wo1"], mask)
    x, eattn = _mha_ref(x, enc, p["wq2"], p["wk2"], p["wv2"], p["wo2"], None)
    ffn = jnp.maximum(x @ p["w1"], 0.0) @ p["w2"]
    return _layer_norm(ffn + x), sattn, eattn


if __name__ == "__main__":
    B, Lq, Lk = 2, 8, 8
    Q_SIZE, K_SIZE = 32, 48       # decoder hidden, encoder hidden

    key = jax.random.PRNGKey(0)
    ks = jax.random.split(key, 16)

    def w(k, shape):
        return jax.random.normal(k, shape, jnp.float32) * 0.05

    params = {
        "wq1": w(ks[0], (Q_SIZE, N_HEADS * D_K)),
        "wk1": w(ks[1], (Q_SIZE, N_HEADS * D_K)),
        "wv1": w(ks[2], (Q_SIZE, N_HEADS * D_V)),
        "wo1": w(ks[3], (N_HEADS * D_V, Q_SIZE)),
        "wq2": w(ks[4], (Q_SIZE, N_HEADS * D_K)),
        "wk2": w(ks[5], (K_SIZE, N_HEADS * D_K)),
        "wv2": w(ks[6], (K_SIZE, N_HEADS * D_V)),
        "wo2": w(ks[7], (N_HEADS * D_V, Q_SIZE)),
        "w1":  w(ks[8], (Q_SIZE, D_FF)),
        "w2":  w(ks[9], (D_FF, Q_SIZE)),
    }

    dec_inputs = jax.random.normal(ks[10], (B, Lq, Q_SIZE), jnp.float32)
    enc_outputs = jax.random.normal(ks[11], (B, Lk, K_SIZE), jnp.float32)
    # causal (subsequent-position) mask: 1.0 above the diagonal == masked
    causal = (jnp.arange(Lq)[None, :] > jnp.arange(Lq)[:, None]).astype(jnp.float32)
    self_mask = jnp.broadcast_to(causal, (B, Lq, Lq))

    out, sattn, eattn = decoder_layer(dec_inputs, enc_outputs, self_mask, params)
    jax.block_until_ready((out, sattn, eattn))

    ref_out, ref_sattn, ref_eattn = decoder_layer_ref(dec_inputs, enc_outputs,
                                                      self_mask, params)
    assert jnp.allclose(out, ref_out, atol=1e-4), "dec_outputs mismatch"
    assert jnp.allclose(sattn, ref_sattn, atol=1e-5), "self-attn mismatch"
    assert jnp.allclose(eattn, ref_eattn, atol=1e-5), "enc-attn mismatch"

    print("KERNEL_OK")
</pallas_src>

<mosaic_0001>
module attributes {stable_mosaic.version = 11 : i64} {
  func.func @decoder_layer_kernel(%arg0: i32, %arg1: memref<16x32xf32, #tpu.memory_space<vmem>>, %arg2: memref<16x48xf32, #tpu.memory_space<vmem>>, %arg3: memref<16x16xf32, #tpu.memory_space<vmem>>, %arg4: memref<16x16xf32, #tpu.memory_space<vmem>>, %arg5: memref<32x64xf32, #tpu.memory_space<vmem>>, %arg6: memref<32x64xf32, #tpu.memory_space<vmem>>, %arg7: memref<32x64xf32, #tpu.memory_space<vmem>>, %arg8: memref<64x32xf32, #tpu.memory_space<vmem>>, %arg9: memref<32x64xf32, #tpu.memory_space<vmem>>, %arg10: memref<48x64xf32, #tpu.memory_space<vmem>>, %arg11: memref<48x64xf32, #tpu.memory_space<vmem>>, %arg12: memref<64x32xf32, #tpu.memory_space<vmem>>, %arg13: memref<32x64xf32, #tpu.memory_space<vmem>>, %arg14: memref<64x32xf32, #tpu.memory_space<vmem>>, %arg15: memref<16x32xf32, #tpu.memory_space<vmem>>, %arg16: memref<4x16x16xf32, #tpu.memory_space<vmem>>, %arg17: memref<4x16x16xf32, #tpu.memory_space<vmem>>) attributes {dimension_semantics = [#tpu.dimension_semantics<arbitrary>], iteration_bounds = array<i64: 1>, scalar_prefetch = 0 : i64, scratch_operands = 0 : i64, tpu.core_type = #tpu.core_type<tc>, window_params = [{pipeline_mode = #tpu.pipeline_mode<synchronous>, transform_indices = @transform_0, window_bounds = array<i64: 16, 32>}, {pipeline_mode = #tpu.pipeline_mode<synchronous>, transform_indices = @transform_1, window_bounds = array<i64: 16, 48>}, {pipeline_mode = #tpu.pipeline_mode<synchronous>, transform_indices = @transform_2, window_bounds = array<i64: 16, 16>}, {pipeline_mode = #tpu.pipeline_mode<synchronous>, transform_indices = @transform_3, window_bounds = array<i64: 16, 16>}, {pipeline_mode = #tpu.pipeline_mode<synchronous>, transform_indices = @transform_4, window_bounds = array<i64: 32, 64>}, {pipeline_mode = #tpu.pipeline_mode<synchronous>, transform_indices = @transform_5, window_bounds = array<i64: 32, 64>}, {pipeline_mode = #tpu.pipeline_mode<synchronous>, transform_indices = @transform_6, window_bounds = array<i64: 32, 64>}, {pipeline_mode = #tpu.pipeline_mode<synchronous>, transform_indices = @transform_7, window_bounds = array<i64: 64, 32>}, {pipeline_mode = #tpu.pipeline_mode<synchronous>, transform_indices = @transform_8, window_bounds = array<i64: 32, 64>}, {pipeline_mode = #tpu.pipeline_mode<synchronous>, transform_indices = @transform_9, window_bounds = array<i64: 48, 64>}, {pipeline_mode = #tpu.pipeline_mode<synchronous>, transform_indices = @transform_10, window_bounds = array<i64: 48, 64>}, {pipeline_mode = #tpu.pipeline_mode<synchronous>, transform_indices = @transform_11, window_bounds = array<i64: 64, 32>}, {pipeline_mode = #tpu.pipeline_mode<synchronous>, transform_indices = @transform_12, window_bounds = array<i64: 32, 64>}, {pipeline_mode = #tpu.pipeline_mode<synchronous>, transform_indices = @transform_13, window_bounds = array<i64: 64, 32>}, {pipeline_mode = #tpu.pipeline_mode<synchronous>, transform_indices = @transform_14, window_bounds = array<i64: 16, 32>}, {pipeline_mode = #tpu.pipeline_mode<synchronous>, transform_indices = @transform_15, window_bounds = array<i64: 4, 16, 16>}, {pipeline_mode = #tpu.pipeline_mode<synchronous>, transform_indices = @transform_16, window_bounds = array<i64: 4, 16, 16>}]} {
    %c0 = arith.constant 0 : index
    %c0_0 = arith.constant 0 : index
    %0 = vector.load %arg1[%c0, %c0_0] : memref<16x32xf32, #tpu.memory_space<vmem>>, vector<16x32xf32>
    %c0_1 = arith.constant 0 : index
    %c0_2 = arith.constant 0 : index
    %1 = vector.load %arg2[%c0_1, %c0_2] : memref<16x48xf32, #tpu.memory_space<vmem>>, vector<16x48xf32>
    %c0_3 = arith.constant 0 : index
    %c0_4 = arith.constant 0 : index
    %2 = vector.load %arg5[%c0_3, %c0_4] : memref<32x64xf32, #tpu.memory_space<vmem>>, vector<32x64xf32>
    %c0_5 = arith.constant 0 : index
    %c0_6 = arith.constant 0 : index
    %3 = vector.load %arg6[%c0_5, %c0_6] : memref<32x64xf32, #tpu.memory_space<vmem>>, vector<32x64xf32>
    %c0_7 = arith.constant 0 : index
    %c0_8 = arith.constant 0 : index
    %4 = vector.load %arg7[%c0_7, %c0_8] : memref<32x64xf32, #tpu.memory_space<vmem>>, vector<32x64xf32>
    %c0_9 = arith.constant 0 : index
    %c0_10 = arith.constant 0 : index
    %5 = vector.load %arg8[%c0_9, %c0_10] : memref<64x32xf32, #tpu.memory_space<vmem>>, vector<64x32xf32>
    %c0_11 = arith.constant 0 : index
    %c0_12 = arith.constant 0 : index
    %6 = vector.load %arg3[%c0_11, %c0_12] : memref<16x16xf32, #tpu.memory_space<vmem>>, vector<16x16xf32>
    %cst = arith.constant dense<0.000000e+00> : vector<16x64xf32>
    %7 = tpu.matmul %0, %2, %cst {dimension_numbers = #tpu.dot_dimension_numbers<[1], [0], [0], [1], [0, 0, 1, 1], [], []>} : vector<16x32xf32>, vector<32x64xf32>, vector<16x64xf32> -> vector<16x64xf32>
    %cst_13 = arith.constant dense<0.000000e+00> : vector<16x64xf32>
    %8 = tpu.matmul %0, %3, %cst_13 {dimension_numbers = #tpu.dot_dimension_numbers<[1], [0], [0], [1], [0, 0, 1, 1], [], []>} : vector<16x32xf32>, vector<32x64xf32>, vector<16x64xf32> -> vector<16x64xf32>
    %cst_14 = arith.constant dense<0.000000e+00> : vector<16x64xf32>
    %9 = tpu.matmul %0, %4, %cst_14 {dimension_numbers = #tpu.dot_dimension_numbers<[1], [0], [0], [1], [0, 0, 1, 1], [], []>} : vector<16x32xf32>, vector<32x64xf32>, vector<16x64xf32> -> vector<16x64xf32>
    %10 = vector.extract_strided_slice %7 {offsets = [0, 0], sizes = [16, 16], strides = [1, 1]} : vector<16x64xf32> to vector<16x16xf32>
    %11 = vector.extract_strided_slice %8 {offsets = [0, 0], sizes = [16, 16], strides = [1, 1]} : vector<16x64xf32> to vector<16x16xf32>
    %12 = vector.extract_strided_slice %9 {offsets = [0, 0], sizes = [16, 16], strides = [1, 1]} : vector<16x64xf32> to vector<16x16xf32>
    %cst_15 = arith.constant dense<0.000000e+00> : vector<16x16xf32>
    %13 = tpu.matmul %10, %11, %cst_15 {dimension_numbers = #tpu.dot_dimension_numbers<[1], [1], [0], [0], [0, 0, 1, 0], [], []>} : vector<16x16xf32>, vector<16x16xf32>, vector<16x16xf32> -> vector<16x16xf32>
    %cst_16 = arith.constant 2.500000e-01 : f32
    %14 = vector.broadcast %cst_16 : f32 to vector<16x16xf32>
    %15 = arith.mulf %13, %14 : vector<16x16xf32>
    %16 = arith.addf %15, %6 : vector<16x16xf32>
    %cst_17 = arith.constant dense<0xFF800000> : vector<16xf32>
    %17 = vector.multi_reduction <maximumf>, %16, %cst_17 [1] : vector<16x16xf32> to vector<16xf32>
    %18 = vector.shape_cast %17 : vector<16xf32> to vector<16x1xf32>
    %19 = vector.broadcast %18 : vector<16x1xf32> to vector<16x16xf32>
    %20 = arith.subf %16, %19 : vector<16x16xf32>
    %21 = math.exp %20 : vector<16x16xf32>
    %cst_18 = arith.constant dense<0.000000e+00> : vector<16xf32>
    %22 = vector.multi_reduction <add>, %21, %cst_18 [1] : vector<16x16xf32> to vector<16xf32>
    %23 = vector.shape_cast %22 : vector<16xf32> to vector<16x1xf32>
    %24 = tpu.reciprocal %23 : vector<16x1xf32> -> vector<16x1xf32>
    %25 = vector.broadcast %24 : vector<16x1xf32> to vector<16x16xf32>
    %26 = arith.mulf %21, %25 : vector<16x16xf32>
    %c0_19 = arith.constant 0 : index
    %c0_20 = arith.constant 0 : index
    %c0_21 = arith.constant 0 : index
    %27 = vector.load %arg16[%c0_19, %c0_20, %c0_21] : memref<4x16x16xf32, #tpu.memory_space<vmem>>, vector<1x16x16xf32>
    %28 = vector.shape_cast %27 : vector<1x16x16xf32> to vector<16x16xf32>
    %29 = vector.shape_cast %26 : vector<16x16xf32> to vector<1x16x16xf32>
    tpu.vector_store %arg16[%c0_19, %c0_20, %c0_21], %29 {strides = array<i32>} : memref<4x16x16xf32, #tpu.memory_space<vmem>>, vector<1x16x16xf32>,
    %cst_22 = arith.constant dense<0.000000e+00> : vector<16x16xf32>
    %30 = tpu.matmul %26, %12, %cst_22 {dimension_numbers = #tpu.dot_dimension_numbers<[1], [0], [0], [1], [0, 0, 1, 1], [], []>} : vector<16x16xf32>, vector<16x16xf32>, vector<16x16xf32> -> vector<16x16xf32>
    %31 = vector.extract_strided_slice %5 {offsets = [0, 0], sizes = [16, 32], strides = [1, 1]} : vector<64x32xf32> to vector<16x32xf32>
    %cst_23 = arith.constant dense<0.000000e+00> : vector<16x32xf32>
    %32 = tpu.matmul %30, %31, %cst_23 {dimension_numbers = #tpu.dot_dimension_numbers<[1], [0], [0], [1], [0, 0, 1, 1], [], []>} : vector<16x16xf32>, vector<16x32xf32>, vector<16x32xf32> -> vector<16x32xf32>
    %33 = arith.addf %0, %32 : vector<16x32xf32>
    %34 = vector.extract_strided_slice %7 {offsets = [0, 16], sizes = [16, 16], strides = [1, 1]} : vector<16x64xf32> to vector<16x16xf32>
    %35 = vector.extract_strided_slice %8 {offsets = [0, 16], sizes = [16, 16], strides = [1, 1]} : vector<16x64xf32> to vector<16x16xf32>
    %36 = vector.extract_strided_slice %9 {offsets = [0, 16], sizes = [16, 16], strides = [1, 1]} : vector<16x64xf32> to vector<16x16xf32>
    %cst_24 = arith.constant dense<0.000000e+00> : vector<16x16xf32>
    %37 = tpu.matmul %34, %35, %cst_24 {dimension_numbers = #tpu.dot_dimension_numbers<[1], [1], [0], [0], [0, 0, 1, 0], [], []>} : vector<16x16xf32>, vector<16x16xf32>, vector<16x16xf32> -> vector<16x16xf32>
    %cst_25 = arith.constant 2.500000e-01 : f32
    %38 = vector.broadcast %cst_25 : f32 to vector<16x16xf32>
    %39 = arith.mulf %37, %38 : vector<16x16xf32>
    %40 = arith.addf %39, %6 : vector<16x16xf32>
    %cst_26 = arith.constant dense<0xFF800000> : vector<16xf32>
    %41 = vector.multi_reduction <maximumf>, %40, %cst_26 [1] : vector<16x16xf32> to vector<16xf32>
    %42 = vector.shape_cast %41 : vector<16xf32> to vector<16x1xf32>
    %43 = vector.broadcast %42 : vector<16x1xf32> to vector<16x16xf32>
    %44 = arith.subf %40, %43 : vector<16x16xf32>
    %45 = math.exp %44 : vector<16x16xf32>
    %cst_27 = arith.constant dense<0.000000e+00> : vector<16xf32>
    %46 = vector.multi_reduction <add>, %45, %cst_27 [1] : vector<16x16xf32> to vector<16xf32>
    %47 = vector.shape_cast %46 : vector<16xf32> to vector<16x1xf32>
    %48 = tpu.reciprocal %47 : vector<16x1xf32> -> vector<16x1xf32>
    %49 = vector.broadcast %48 : vector<16x1xf32> to vector<16x16xf32>
    %50 = arith.mulf %45, %49 : vector<16x16xf32>
    %c1 = arith.constant 1 : index
    %c0_28 = arith.constant 0 : index
    %c0_29 = arith.constant 0 : index
    %51 = vector.load %arg16[%c1, %c0_28, %c0_29] : memref<4x16x16xf32, #tpu.memory_space<vmem>>, vector<1x16x16xf32>
    %52 = vector.shape_cast %51 : vector<1x16x16xf32> to vector<16x16xf32>
    %53 = vector.shape_cast %50 : vector<16x16xf32> to vector<1x16x16xf32>
    tpu.vector_store %arg16[%c1, %c0_28, %c0_29], %53 {strides = array<i32>} : memref<4x16x16xf32, #tpu.memory_space<vmem>>, vector<1x16x16xf32>,
    %cst_30 = arith.constant dense<0.000000e+00> : vector<16x16xf32>
    %54 = tpu.matmul %50, %36, %cst_30 {dimension_numbers = #tpu.dot_dimension_numbers<[1], [0], [0], [1], [0, 0, 1, 1], [], []>} : vector<16x16xf32>, vector<16x16xf32>, vector<16x16xf32> -> vector<16x16xf32>
    %55 = vector.extract_strided_slice %5 {offsets = [16, 0], sizes = [16, 32], strides = [1, 1]} : vector<64x32xf32> to vector<16x32xf32>
    %cst_31 = arith.constant dense<0.000000e+00> : vector<16x32xf32>
    %56 = tpu.matmul %54, %55, %cst_31 {dimension_numbers = #tpu.dot_dimension_numbers<[1], [0], [0], [1], [0, 0, 1, 1], [], []>} : vector<16x16xf32>, vector<16x32xf32>, vector<16x32xf32> -> vector<16x32xf32>
    %57 = arith.addf %33, %56 : vector<16x32xf32>
    %58 = vector.extract_strided_slice %7 {offsets = [0, 32], sizes = [16, 16], strides = [1, 1]} : vector<16x64xf32> to vector<16x16xf32>
    %59 = vector.extract_strided_slice %8 {offsets = [0, 32], sizes = [16, 16], strides = [1, 1]} : vector<16x64xf32> to vector<16x16xf32>
    %60 = vector.extract_strided_slice %9 {offsets = [0, 32], sizes = [16, 16], strides = [1, 1]} : vector<16x64xf32> to vector<16x16xf32>
    %cst_32 = arith.constant dense<0.000000e+00> : vector<16x16xf32>
    %61 = tpu.matmul %58, %59, %cst_32 {dimension_numbers = #tpu.dot_dimension_numbers<[1], [1], [0], [0], [0, 0, 1, 0], [], []>} : vector<16x16xf32>, vector<16x16xf32>, vector<16x16xf32> -> vector<16x16xf32>
    %cst_33 = arith.constant 2.500000e-01 : f32
    %62 = vector.broadcast %cst_33 : f32 to vector<16x16xf32>
    %63 = arith.mulf %61, %62 : vector<16x16xf32>
    %64 = arith.addf %63, %6 : vector<16x16xf32>
    %cst_34 = arith.constant dense<0xFF800000> : vector<16xf32>
    %65 = vector.multi_reduction <maximumf>, %64, %cst_34 [1] : vector<16x16xf32> to vector<16xf32>
    %66 = vector.shape_cast %65 : vector<16xf32> to vector<16x1xf32>
    %67 = vector.broadcast %66 : vector<16x1xf32> to vector<16x16xf32>
    %68 = arith.subf %64, %67 : vector<16x16xf32>
    %69 = math.exp %68 : vector<16x16xf32>
    %cst_35 = arith.constant dense<0.000000e+00> : vector<16xf32>
    %70 = vector.multi_reduction <add>, %69, %cst_35 [1] : vector<16x16xf32> to vector<16xf32>
    %71 = vector.shape_cast %70 : vector<16xf32> to vector<16x1xf32>
    %72 = tpu.reciprocal %71 : vector<16x1xf32> -> vector<16x1xf32>
    %73 = vector.broadcast %72 : vector<16x1xf32> to vector<16x16xf32>
    %74 = arith.mulf %69, %73 : vector<16x16xf32>
    %c2 = arith.constant 2 : index
    %c0_36 = arith.constant 0 : index
    %c0_37 = arith.constant 0 : index
    %75 = vector.load %arg16[%c2, %c0_36, %c0_37] : memref<4x16x16xf32, #tpu.memory_space<vmem>>, vector<1x16x16xf32>
    %76 = vector.shape_cast %75 : vector<1x16x16xf32> to vector<16x16xf32>
    %77 = vector.shape_cast %74 : vector<16x16xf32> to vector<1x16x16xf32>
    tpu.vector_store %arg16[%c2, %c0_36, %c0_37], %77 {strides = array<i32>} : memref<4x16x16xf32, #tpu.memory_space<vmem>>, vector<1x16x16xf32>,
    %cst_38 = arith.constant dense<0.000000e+00> : vector<16x16xf32>
    %78 = tpu.matmul %74, %60, %cst_38 {dimension_numbers = #tpu.dot_dimension_numbers<[1], [0], [0], [1], [0, 0, 1, 1], [], []>} : vector<16x16xf32>, vector<16x16xf32>, vector<16x16xf32> -> vector<16x16xf32>
    %79 = vector.extract_strided_slice %5 {offsets = [32, 0], sizes = [16, 32], strides = [1, 1]} : vector<64x32xf32> to vector<16x32xf32>
    %cst_39 = arith.constant dense<0.000000e+00> : vector<16x32xf32>
    %80 = tpu.matmul %78, %79, %cst_39 {dimension_numbers = #tpu.dot_dimension_numbers<[1], [0], [0], [1], [0, 0, 1, 1], [], []>} : vector<16x16xf32>, vector<16x32xf32>, vector<16x32xf32> -> vector<16x32xf32>
    %81 = arith.addf %57, %80 : vector<16x32xf32>
    %82 = vector.extract_strided_slice %7 {offsets = [0, 48], sizes = [16, 16], strides = [1, 1]} : vector<16x64xf32> to vector<16x16xf32>
    %83 = vector.extract_strided_slice %8 {offsets = [0, 48], sizes = [16, 16], strides = [1, 1]} : vector<16x64xf32> to vector<16x16xf32>
    %84 = vector.extract_strided_slice %9 {offsets = [0, 48], sizes = [16, 16], strides = [1, 1]} : vector<16x64xf32> to vector<16x16xf32>
    %cst_40 = arith.constant dense<0.000000e+00> : vector<16x16xf32>
    %85 = tpu.matmul %82, %83, %cst_40 {dimension_numbers = #tpu.dot_dimension_numbers<[1], [1], [0], [0], [0, 0, 1, 0], [], []>} : vector<16x16xf32>, vector<16x16xf32>, vector<16x16xf32> -> vector<16x16xf32>
    %cst_41 = arith.constant 2.500000e-01 : f32
    %86 = vector.broadcast %cst_41 : f32 to vector<16x16xf32>
    %87 = arith.mulf %85, %86 : vector<16x16xf32>
    %88 = arith.addf %87, %6 : vector<16x16xf32>
    %cst_42 = arith.constant dense<0xFF800000> : vector<16xf32>
    %89 = vector.multi_reduction <maximumf>, %88, %cst_42 [1] : vector<16x16xf32> to vector<16xf32>
    %90 = vector.shape_cast %89 : vector<16xf32> to vector<16x1xf32>
    %91 = vector.broadcast %90 : vector<16x1xf32> to vector<16x16xf32>
    %92 = arith.subf %88, %91 : vector<16x16xf32>
    %93 = math.exp %92 : vector<16x16xf32>
    %cst_43 = arith.constant dense<0.000000e+00> : vector<16xf32>
    %94 = vector.multi_reduction <add>, %93, %cst_43 [1] : vector<16x16xf32> to vector<16xf32>
    %95 = vector.shape_cast %94 : vector<16xf32> to vector<16x1xf32>
    %96 = tpu.reciprocal %95 : vector<16x1xf32> -> vector<16x1xf32>
    %97 = vector.broadcast %96 : vector<16x1xf32> to vector<16x16xf32>
    %98 = arith.mulf %93, %97 : vector<16x16xf32>
    %c3 = arith.constant 3 : index
    %c0_44 = arith.constant 0 : index
    %c0_45 = arith.constant 0 : index
    %99 = vector.load %arg16[%c3, %c0_44, %c0_45] : memref<4x16x16xf32, #tpu.memory_space<vmem>>, vector<1x16x16xf32>
    %100 = vector.shape_cast %99 : vector<1x16x16xf32> to vector<16x16xf32>
    %101 = vector.shape_cast %98 : vector<16x16xf32> to vector<1x16x16xf32>
    tpu.vector_store %arg16[%c3, %c0_44, %c0_45], %101 {strides = array<i32>} : memref<4x16x16xf32, #tpu.memory_space<vmem>>, vector<1x16x16xf32>,
    %cst_46 = arith.constant dense<0.000000e+00> : vector<16x16xf32>
    %102 = tpu.matmul %98, %84, %cst_46 {dimension_numbers = #tpu.dot_dimension_numbers<[1], [0], [0], [1], [0, 0, 1, 1], [], []>} : vector<16x16xf32>, vector<16x16xf32>, vector<16x16xf32> -> vector<16x16xf32>
    %103 = vector.extract_strided_slice %5 {offsets = [48, 0], sizes = [16, 32], strides = [1, 1]} : vector<64x32xf32> to vector<16x32xf32>
    %cst_47 = arith.constant dense<0.000000e+00> : vector<16x32xf32>
    %104 = tpu.matmul %102, %103, %cst_47 {dimension_numbers = #tpu.dot_dimension_numbers<[1], [0], [0], [1], [0, 0, 1, 1], [], []>} : vector<16x16xf32>, vector<16x32xf32>, vector<16x32xf32> -> vector<16x32xf32>
    %105 = arith.addf %81, %104 : vector<16x32xf32>
    %cst_48 = arith.constant dense<0.000000e+00> : vector<16xf32>
    %106 = vector.multi_reduction <add>, %105, %cst_48 [1] : vector<16x32xf32> to vector<16xf32>
    %107 = vector.shape_cast %106 : vector<16xf32> to vector<16x1xf32>
    %cst_49 = arith.constant 3.200000e+01 : f32
    %108 = vector.broadcast %cst_49 : f32 to vector<16x1xf32>
    %109 = arith.divf %107, %108 : vector<16x1xf32>
    %110 = vector.broadcast %109 : vector<16x1xf32> to vector<16x32xf32>
    %111 = arith.subf %105, %110 : vector<16x32xf32>
    %112 = arith.mulf %111, %111 : vector<16x32xf32>
    %cst_50 = arith.constant dense<0.000000e+00> : vector<16xf32>
    %113 = vector.multi_reduction <add>, %112, %cst_50 [1] : vector<16x32xf32> to vector<16xf32>
    %114 = vector.shape_cast %113 : vector<16xf32> to vector<16x1xf32>
    %cst_51 = arith.constant 3.200000e+01 : f32
    %115 = vector.broadcast %cst_51 : f32 to vector<16x1xf32>
    %116 = arith.divf %114, %115 : vector<16x1xf32>
    %117 = vector.broadcast %109 : vector<16x1xf32> to vector<16x32xf32>
    %118 = arith.subf %105, %117 : vector<16x32xf32>
    %cst_52 = arith.constant 9.99999974E-6 : f32
    %119 = vector.broadcast %cst_52 : f32 to vector<16x1xf32>
    %120 = arith.addf %116, %119 : vector<16x1xf32>
    %121 = math.rsqrt %120 : vector<16x1xf32>
    %122 = vector.broadcast %121 : vector<16x1xf32> to vector<16x32xf32>
    %123 = arith.mulf %118, %122 : vector<16x32xf32>
    %c0_53 = arith.constant 0 : index
    %c0_54 = arith.constant 0 : index
    %124 = vector.load %arg9[%c0_53, %c0_54] : memref<32x64xf32, #tpu.memory_space<vmem>>, vector<32x64xf32>
    %c0_55 = arith.constant 0 : index
    %c0_56 = arith.constant 0 : index
    %125 = vector.load %arg10[%c0_55, %c0_56] : memref<48x64xf32, #tpu.memory_space<vmem>>, vector<48x64xf32>
    %c0_57 = arith.constant 0 : index
    %c0_58 = arith.constant 0 : index
    %126 = vector.load %arg11[%c0_57, %c0_58] : memref<48x64xf32, #tpu.memory_space<vmem>>, vector<48x64xf32>
    %c0_59 = arith.constant 0 : index
    %c0_60 = arith.constant 0 : index
    %127 = vector.load %arg12[%c0_59, %c0_60] : memref<64x32xf32, #tpu.memory_space<vmem>>, vector<64x32xf32>
    %c0_61 = arith.constant 0 : index
    %c0_62 = arith.constant 0 : index
    %128 = vector.load %arg4[%c0_61, %c0_62] : memref<16x16xf32, #tpu.memory_space<vmem>>, vector<16x16xf32>
    %cst_63 = arith.constant dense<0.000000e+00> : vector<16x64xf32>
    %129 = tpu.matmul %123, %124, %cst_63 {dimension_numbers = #tpu.dot_dimension_numbers<[1], [0], [0], [1], [0, 0, 1, 1], [], []>} : vector<16x32xf32>, vector<32x64xf32>, vector<16x64xf32> -> vector<16x64xf32>
    %cst_64 = arith.constant dense<0.000000e+00> : vector<16x64xf32>
    %130 = tpu.matmul %1, %125, %cst_64 {dimension_numbers = #tpu.dot_dimension_numbers<[1], [0], [0], [1], [0, 0, 1, 1], [], []>} : vector<16x48xf32>, vector<48x64xf32>, vector<16x64xf32> -> vector<16x64xf32>
    %cst_65 = arith.constant dense<0.000000e+00> : vector<16x64xf32>
    %131 = tpu.matmul %1, %126, %cst_65 {dimension_numbers = #tpu.dot_dimension_numbers<[1], [0], [0], [1], [0, 0, 1, 1], [], []>} : vector<16x48xf32>, vector<48x64xf32>, vector<16x64xf32> -> vector<16x64xf32>
    %132 = vector.extract_strided_slice %129 {offsets = [0, 0], sizes = [16, 16], strides = [1, 1]} : vector<16x64xf32> to vector<16x16xf32>
    %133 = vector.extract_strided_slice %130 {offsets = [0, 0], sizes = [16, 16], strides = [1, 1]} : vector<16x64xf32> to vector<16x16xf32>
    %134 = vector.extract_strided_slice %131 {offsets = [0, 0], sizes = [16, 16], strides = [1, 1]} : vector<16x64xf32> to vector<16x16xf32>
    %cst_66 = arith.constant dense<0.000000e+00> : vector<16x16xf32>
    %135 = tpu.matmul %132, %133, %cst_66 {dimension_numbers = #tpu.dot_dimension_numbers<[1], [1], [0], [0], [0, 0, 1, 0], [], []>} : vector<16x16xf32>, vector<16x16xf32>, vector<16x16xf32> -> vector<16x16xf32>
    %cst_67 = arith.constant 2.500000e-01 : f32
    %136 = vector.broadcast %cst_67 : f32 to vector<16x16xf32>
    %137 = arith.mulf %135, %136 : vector<16x16xf32>
    %138 = arith.addf %137, %128 : vector<16x16xf32>
    %cst_68 = arith.constant dense<0xFF800000> : vector<16xf32>
    %139 = vector.multi_reduction <maximumf>, %138, %cst_68 [1] : vector<16x16xf32> to vector<16xf32>
    %140 = vector.shape_cast %139 : vector<16xf32> to vector<16x1xf32>
    %141 = vector.broadcast %140 : vector<16x1xf32> to vector<16x16xf32>
    %142 = arith.subf %138, %141 : vector<16x16xf32>
    %143 = math.exp %142 : vector<16x16xf32>
    %cst_69 = arith.constant dense<0.000000e+00> : vector<16xf32>
    %144 = vector.multi_reduction <add>, %143, %cst_69 [1] : vector<16x16xf32> to vector<16xf32>
    %145 = vector.shape_cast %144 : vector<16xf32> to vector<16x1xf32>
    %146 = tpu.reciprocal %145 : vector<16x1xf32> -> vector<16x1xf32>
    %147 = vector.broadcast %146 : vector<16x1xf32> to vector<16x16xf32>
    %148 = arith.mulf %143, %147 : vector<16x16xf32>
    %c0_70 = arith.constant 0 : index
    %c0_71 = arith.constant 0 : index
    %c0_72 = arith.constant 0 : index
    %149 = vector.load %arg17[%c0_70, %c0_71, %c0_72] : memref<4x16x16xf32, #tpu.memory_space<vmem>>, vector<1x16x16xf32>
    %150 = vector.shape_cast %149 : vector<1x16x16xf32> to vector<16x16xf32>
    %151 = vector.shape_cast %148 : vector<16x16xf32> to vector<1x16x16xf32>
    tpu.vector_store %arg17[%c0_70, %c0_71, %c0_72], %151 {strides = array<i32>} : memref<4x16x16xf32, #tpu.memory_space<vmem>>, vector<1x16x16xf32>,
    %cst_73 = arith.constant dense<0.000000e+00> : vector<16x16xf32>
    %152 = tpu.matmul %148, %134, %cst_73 {dimension_numbers = #tpu.dot_dimension_numbers<[1], [0], [0], [1], [0, 0, 1, 1], [], []>} : vector<16x16xf32>, vector<16x16xf32>, vector<16x16xf32> -> vector<16x16xf32>
    %153 = vector.extract_strided_slice %127 {offsets = [0, 0], sizes = [16, 32], strides = [1, 1]} : vector<64x32xf32> to vector<16x32xf32>
    %cst_74 = arith.constant dense<0.000000e+00> : vector<16x32xf32>
    %154 = tpu.matmul %152, %153, %cst_74 {dimension_numbers = #tpu.dot_dimension_numbers<[1], [0], [0], [1], [0, 0, 1, 1], [], []>} : vector<16x16xf32>, vector<16x32xf32>, vector<16x32xf32> -> vector<16x32xf32>
    %155 = arith.addf %123, %154 : vector<16x32xf32>
    %156 = vector.extract_strided_slice %129 {offsets = [0, 16], sizes = [16, 16], strides = [1, 1]} : vector<16x64xf32> to vector<16x16xf32>
    %157 = vector.extract_strided_slice %130 {offsets = [0, 16], sizes = [16, 16], strides = [1, 1]} : vector<16x64xf32> to vector<16x16xf32>
    %158 = vector.extract_strided_slice %131 {offsets = [0, 16], sizes = [16, 16], strides = [1, 1]} : vector<16x64xf32> to vector<16x16xf32>
    %cst_75 = arith.constant dense<0.000000e+00> : vector<16x16xf32>
    %159 = tpu.matmul %156, %157, %cst_75 {dimension_numbers = #tpu.dot_dimension_numbers<[1], [1], [0], [0], [0, 0, 1, 0], [], []>} : vector<16x16xf32>, vector<16x16xf32>, vector<16x16xf32> -> vector<16x16xf32>
    %cst_76 = arith.constant 2.500000e-01 : f32
    %160 = vector.broadcast %cst_76 : f32 to vector<16x16xf32>
    %161 = arith.mulf %159, %160 : vector<16x16xf32>
    %162 = arith.addf %161, %128 : vector<16x16xf32>
    %cst_77 = arith.constant dense<0xFF800000> : vector<16xf32>
    %163 = vector.multi_reduction <maximumf>, %162, %cst_77 [1] : vector<16x16xf32> to vector<16xf32>
    %164 = vector.shape_cast %163 : vector<16xf32> to vector<16x1xf32>
    %165 = vector.broadcast %164 : vector<16x1xf32> to vector<16x16xf32>
    %166 = arith.subf %162, %165 : vector<16x16xf32>
    %167 = math.exp %166 : vector<16x16xf32>
    %cst_78 = arith.constant dense<0.000000e+00> : vector<16xf32>
    %168 = vector.multi_reduction <add>, %167, %cst_78 [1] : vector<16x16xf32> to vector<16xf32>
    %169 = vector.shape_cast %168 : vector<16xf32> to vector<16x1xf32>
    %170 = tpu.reciprocal %169 : vector<16x1xf32> -> vector<16x1xf32>
    %171 = vector.broadcast %170 : vector<16x1xf32> to vector<16x16xf32>
    %172 = arith.mulf %167, %171 : vector<16x16xf32>
    %c1_79 = arith.constant 1 : index
    %c0_80 = arith.constant 0 : index
    %c0_81 = arith.constant 0 : index
    %173 = vector.load %arg17[%c1_79, %c0_80, %c0_81] : memref<4x16x16xf32, #tpu.memory_space<vmem>>, vector<1x16x16xf32>
    %174 = vector.shape_cast %173 : vector<1x16x16xf32> to vector<16x16xf32>
    %175 = vector.shape_cast %172 : vector<16x16xf32> to vector<1x16x16xf32>
    tpu.vector_store %arg17[%c1_79, %c0_80, %c0_81], %175 {strides = array<i32>} : memref<4x16x16xf32, #tpu.memory_space<vmem>>, vector<1x16x16xf32>,
    %cst_82 = arith.constant dense<0.000000e+00> : vector<16x16xf32>
    %176 = tpu.matmul %172, %158, %cst_82 {dimension_numbers = #tpu.dot_dimension_numbers<[1], [0], [0], [1], [0, 0, 1, 1], [], []>} : vector<16x16xf32>, vector<16x16xf32>, vector<16x16xf32> -> vector<16x16xf32>
    %177 = vector.extract_strided_slice %127 {offsets = [16, 0], sizes = [16, 32], strides = [1, 1]} : vector<64x32xf32> to vector<16x32xf32>
    %cst_83 = arith.constant dense<0.000000e+00> : vector<16x32xf32>
    %178 = tpu.matmul %176, %177, %cst_83 {dimension_numbers = #tpu.dot_dimension_numbers<[1], [0], [0], [1], [0, 0, 1, 1], [], []>} : vector<16x16xf32>, vector<16x32xf32>, vector<16x32xf32> -> vector<16x32xf32>
    %179 = arith.addf %155, %178 : vector<16x32xf32>
    %180 = vector.extract_strided_slice %129 {offsets = [0, 32], sizes = [16, 16], strides = [1, 1]} : vector<16x64xf32> to vector<16x16xf32>
    %181 = vector.extract_strided_slice %130 {offsets = [0, 32], sizes = [16, 16], strides = [1, 1]} : vector<16x64xf32> to vector<16x16xf32>
    %182 = vector.extract_strided_slice %131 {offsets = [0, 32], sizes = [16, 16], strides = [1, 1]} : vector<16x64xf32> to vector<16x16xf32>
    %cst_84 = arith.constant dense<0.000000e+00> : vector<16x16xf32>
    %183 = tpu.matmul %180, %181, %cst_84 {dimension_numbers = #tpu.dot_dimension_numbers<[1], [1], [0], [0], [0, 0, 1, 0], [], []>} : vector<16x16xf32>, vector<16x16xf32>, vector<16x16xf32> -> vector<16x16xf32>
    %cst_85 = arith.constant 2.500000e-01 : f32
    %184 = vector.broadcast %cst_85 : f32 to vector<16x16xf32>
    %185 = arith.mulf %183, %184 : vector<16x16xf32>
    %186 = arith.addf %185, %128 : vector<16x16xf32>
    %cst_86 = arith.constant dense<0xFF800000> : vector<16xf32>
    %187 = vector.multi_reduction <maximumf>, %186, %cst_86 [1] : vector<16x16xf32> to vector<16xf32>
    %188 = vector.shape_cast %187 : vector<16xf32> to vector<16x1xf32>
    %189 = vector.broadcast %188 : vector<16x1xf32> to vector<16x16xf32>
    %190 = arith.subf %186, %189 : vector<16x16xf32>
    %191 = math.exp %190 : vector<16x16xf32>
    %cst_87 = arith.constant dense<0.000000e+00> : vector<16xf32>
    %192 = vector.multi_reduction <add>, %191, %cst_87 [1] : vector<16x16xf32> to vector<16xf32>
    %193 = vector.shape_cast %192 : vector<16xf32> to vector<16x1xf32>
    %194 = tpu.reciprocal %193 : vector<16x1xf32> -> vector<16x1xf32>
    %195 = vector.broadcast %194 : vector<16x1xf32> to vector<16x16xf32>
    %196 = arith.mulf %191, %195 : vector<16x16xf32>
    %c2_88 = arith.constant 2 : index
    %c0_89 = arith.constant 0 : index
    %c0_90 = arith.constant 0 : index
    %197 = vector.load %arg17[%c2_88, %c0_89, %c0_90] : memref<4x16x16xf32, #tpu.memory_space<vmem>>, vector<1x16x16xf32>
    %198 = vector.shape_cast %197 : vector<1x16x16xf32> to vector<16x16xf32>
    %199 = vector.shape_cast %196 : vector<16x16xf32> to vector<1x16x16xf32>
    tpu.vector_store %arg17[%c2_88, %c0_89, %c0_90], %199 {strides = array<i32>} : memref<4x16x16xf32, #tpu.memory_space<vmem>>, vector<1x16x16xf32>,
    %cst_91 = arith.constant dense<0.000000e+00> : vector<16x16xf32>
    %200 = tpu.matmul %196, %182, %cst_91 {dimension_numbers = #tpu.dot_dimension_numbers<[1], [0], [0], [1], [0, 0, 1, 1], [], []>} : vector<16x16xf32>, vector<16x16xf32>, vector<16x16xf32> -> vector<16x16xf32>
    %201 = vector.extract_strided_slice %127 {offsets = [32, 0], sizes = [16, 32], strides = [1, 1]} : vector<64x32xf32> to vector<16x32xf32>
    %cst_92 = arith.constant dense<0.000000e+00> : vector<16x32xf32>
    %202 = tpu.matmul %200, %201, %cst_92 {dimension_numbers = #tpu.dot_dimension_numbers<[1], [0], [0], [1], [0, 0, 1, 1], [], []>} : vector<16x16xf32>, vector<16x32xf32>, vector<16x32xf32> -> vector<16x32xf32>
    %203 = arith.addf %179, %202 : vector<16x32xf32>
    %204 = vector.extract_strided_slice %129 {offsets = [0, 48], sizes = [16, 16], strides = [1, 1]} : vector<16x64xf32> to vector<16x16xf32>
    %205 = vector.extract_strided_slice %130 {offsets = [0, 48], sizes = [16, 16], strides = [1, 1]} : vector<16x64xf32> to vector<16x16xf32>
    %206 = vector.extract_strided_slice %131 {offsets = [0, 48], sizes = [16, 16], strides = [1, 1]} : vector<16x64xf32> to vector<16x16xf32>
    %cst_93 = arith.constant dense<0.000000e+00> : vector<16x16xf32>
    %207 = tpu.matmul %204, %205, %cst_93 {dimension_numbers = #tpu.dot_dimension_numbers<[1], [1], [0], [0], [0, 0, 1, 0], [], []>} : vector<16x16xf32>, vector<16x16xf32>, vector<16x16xf32> -> vector<16x16xf32>
    %cst_94 = arith.constant 2.500000e-01 : f32
    %208 = vector.broadcast %cst_94 : f32 to vector<16x16xf32>
    %209 = arith.mulf %207, %208 : vector<16x16xf32>
    %210 = arith.addf %209, %128 : vector<16x16xf32>
    %cst_95 = arith.constant dense<0xFF800000> : vector<16xf32>
    %211 = vector.multi_reduction <maximumf>, %210, %cst_95 [1] : vector<16x16xf32> to vector<16xf32>
    %212 = vector.shape_cast %211 : vector<16xf32> to vector<16x1xf32>
    %213 = vector.broadcast %212 : vector<16x1xf32> to vector<16x16xf32>
    %214 = arith.subf %210, %213 : vector<16x16xf32>
    %215 = math.exp %214 : vector<16x16xf32>
    %cst_96 = arith.constant dense<0.000000e+00> : vector<16xf32>
    %216 = vector.multi_reduction <add>, %215, %cst_96 [1] : vector<16x16xf32> to vector<16xf32>
    %217 = vector.shape_cast %216 : vector<16xf32> to vector<16x1xf32>
    %218 = tpu.reciprocal %217 : vector<16x1xf32> -> vector<16x1xf32>
    %219 = vector.broadcast %218 : vector<16x1xf32> to vector<16x16xf32>
    %220 = arith.mulf %215, %219 : vector<16x16xf32>
    %c3_97 = arith.constant 3 : index
    %c0_98 = arith.constant 0 : index
    %c0_99 = arith.constant 0 : index
    %221 = vector.load %arg17[%c3_97, %c0_98, %c0_99] : memref<4x16x16xf32, #tpu.memory_space<vmem>>, vector<1x16x16xf32>
    %222 = vector.shape_cast %221 : vector<1x16x16xf32> to vector<16x16xf32>
    %223 = vector.shape_cast %220 : vector<16x16xf32> to vector<1x16x16xf32>
    tpu.vector_store %arg17[%c3_97, %c0_98, %c0_99], %223 {strides = array<i32>} : memref<4x16x16xf32, #tpu.memory_space<vmem>>, vector<1x16x16xf32>,
    %cst_100 = arith.constant dense<0.000000e+00> : vector<16x16xf32>
    %224 = tpu.matmul %220, %206, %cst_100 {dimension_numbers = #tpu.dot_dimension_numbers<[1], [0], [0], [1], [0, 0, 1, 1], [], []>} : vector<16x16xf32>, vector<16x16xf32>, vector<16x16xf32> -> vector<16x16xf32>
    %225 = vector.extract_strided_slice %127 {offsets = [48, 0], sizes = [16, 32], strides = [1, 1]} : vector<64x32xf32> to vector<16x32xf32>
    %cst_101 = arith.constant dense<0.000000e+00> : vector<16x32xf32>
    %226 = tpu.matmul %224, %225, %cst_101 {dimension_numbers = #tpu.dot_dimension_numbers<[1], [0], [0], [1], [0, 0, 1, 1], [], []>} : vector<16x16xf32>, vector<16x32xf32>, vector<16x32xf32> -> vector<16x32xf32>
    %227 = arith.addf %203, %226 : vector<16x32xf32>
    %cst_102 = arith.constant dense<0.000000e+00> : vector<16xf32>
    %228 = vector.multi_reduction <add>, %227, %cst_102 [1] : vector<16x32xf32> to vector<16xf32>
    %229 = vector.shape_cast %228 : vector<16xf32> to vector<16x1xf32>
    %cst_103 = arith.constant 3.200000e+01 : f32
    %230 = vector.broadcast %cst_103 : f32 to vector<16x1xf32>
    %231 = arith.divf %229, %230 : vector<16x1xf32>
    %232 = vector.broadcast %231 : vector<16x1xf32> to vector<16x32xf32>
    %233 = arith.subf %227, %232 : vector<16x32xf32>
    %234 = arith.mulf %233, %233 : vector<16x32xf32>
    %cst_104 = arith.constant dense<0.000000e+00> : vector<16xf32>
    %235 = vector.multi_reduction <add>, %234, %cst_104 [1] : vector<16x32xf32> to vector<16xf32>
    %236 = vector.shape_cast %235 : vector<16xf32> to vector<16x1xf32>
    %cst_105 = arith.constant 3.200000e+01 : f32
    %237 = vector.broadcast %cst_105 : f32 to vector<16x1xf32>
    %238 = arith.divf %236, %237 : vector<16x1xf32>
    %239 = vector.broadcast %231 : vector<16x1xf32> to vector<16x32xf32>
    %240 = arith.subf %227, %239 : vector<16x32xf32>
    %cst_106 = arith.constant 9.99999974E-6 : f32
    %241 = vector.broadcast %cst_106 : f32 to vector<16x1xf32>
    %242 = arith.addf %238, %241 : vector<16x1xf32>
    %243 = math.rsqrt %242 : vector<16x1xf32>
    %244 = vector.broadcast %243 : vector<16x1xf32> to vector<16x32xf32>
    %245 = arith.mulf %240, %244 : vector<16x32xf32>
    %c0_107 = arith.constant 0 : index
    %c0_108 = arith.constant 0 : index
    %246 = vector.load %arg13[%c0_107, %c0_108] : memref<32x64xf32, #tpu.memory_space<vmem>>, vector<32x64xf32>
    %cst_109 = arith.constant dense<0.000000e+00> : vector<16x64xf32>
    %247 = tpu.matmul %245, %246, %cst_109 {dimension_numbers = #tpu.dot_dimension_numbers<[1], [0], [0], [1], [0, 0, 1, 1], [], []>} : vector<16x32xf32>, vector<32x64xf32>, vector<16x64xf32> -> vector<16x64xf32>
    %cst_110 = arith.constant 0.000000e+00 : f32
    %248 = vector.broadcast %cst_110 : f32 to vector<16x64xf32>
    %249 = arith.maximumf %247, %248 : vector<16x64xf32>
    %c0_111 = arith.constant 0 : index
    %c0_112 = arith.constant 0 : index
    %250 = vector.load %arg14[%c0_111, %c0_112] : memref<64x32xf32, #tpu.memory_space<vmem>>, vector<64x32xf32>
    %cst_113 = arith.constant dense<0.000000e+00> : vector<16x32xf32>
    %251 = tpu.matmul %249, %250, %cst_113 {dimension_numbers = #tpu.dot_dimension_numbers<[1], [0], [0], [1], [0, 0, 1, 1], [], []>} : vector<16x64xf32>, vector<64x32xf32>, vector<16x32xf32> -> vector<16x32xf32>
    %252 = arith.addf %251, %245 : vector<16x32xf32>
    %cst_114 = arith.constant dense<0.000000e+00> : vector<16xf32>
    %253 = vector.multi_reduction <add>, %252, %cst_114 [1] : vector<16x32xf32> to vector<16xf32>
    %254 = vector.shape_cast %253 : vector<16xf32> to vector<16x1xf32>
    %cst_115 = arith.constant 3.200000e+01 : f32
    %255 = vector.broadcast %cst_115 : f32 to vector<16x1xf32>
    %256 = arith.divf %254, %255 : vector<16x1xf32>
    %257 = vector.broadcast %256 : vector<16x1xf32> to vector<16x32xf32>
    %258 = arith.subf %252, %257 : vector<16x32xf32>
    %259 = arith.mulf %258, %258 : vector<16x32xf32>
    %cst_116 = arith.constant dense<0.000000e+00> : vector<16xf32>
    %260 = vector.multi_reduction <add>, %259, %cst_116 [1] : vector<16x32xf32> to vector<16xf32>
    %261 = vector.shape_cast %260 : vector<16xf32> to vector<16x1xf32>
    %cst_117 = arith.constant 3.200000e+01 : f32
    %262 = vector.broadcast %cst_117 : f32 to vector<16x1xf32>
    %263 = arith.divf %261, %262 : vector<16x1xf32>
    %264 = vector.broadcast %256 : vector<16x1xf32> to vector<16x32xf32>
    %265 = arith.subf %252, %264 : vector<16x32xf32>
    %cst_118 = arith.constant 9.99999974E-6 : f32
    %266 = vector.broadcast %cst_118 : f32 to vector<16x1xf32>
    %267 = arith.addf %263, %266 : vector<16x1xf32>
    %268 = math.rsqrt %267 : vector<16x1xf32>
    %269 = vector.broadcast %268 : vector<16x1xf32> to vector<16x32xf32>
    %270 = arith.mulf %265, %269 : vector<16x32xf32>
    %c0_119 = arith.constant 0 : index
    %c0_120 = arith.constant 0 : index
    %271 = vector.load %arg15[%c0_119, %c0_120] : memref<16x32xf32, #tpu.memory_space<vmem>>, vector<16x32xf32>
    tpu.vector_store %arg15[%c0_119, %c0_120], %270 {strides = array<i32>} : memref<16x32xf32, #tpu.memory_space<vmem>>, vector<16x32xf32>,
    return
  }
  func.func @transform_0(%arg0: i32) -> (i32, i32) {
    %c0_i32 = arith.constant 0 : i32
    %c0_i32_0 = arith.constant 0 : i32
    %c0_i32_1 = arith.constant 0 : i32
    return %c0_i32, %c0_i32_0 : i32, i32
  }
  func.func @transform_1(%arg0: i32) -> (i32, i32) {
    %c0_i32 = arith.constant 0 : i32
    %c0_i32_0 = arith.constant 0 : i32
    %c0_i32_1 = arith.constant 0 : i32
    return %c0_i32, %c0_i32_0 : i32, i32
  }
  func.func @transform_2(%arg0: i32) -> (i32, i32) {
    %c0_i32 = arith.constant 0 : i32
    %c0_i32_0 = arith.constant 0 : i32
    %c0_i32_1 = arith.constant 0 : i32
    return %c0_i32, %c0_i32_0 : i32, i32
  }
  func.func @transform_3(%arg0: i32) -> (i32, i32) {
    %c0_i32 = arith.constant 0 : i32
    %c0_i32_0 = arith.constant 0 : i32
    %c0_i32_1 = arith.constant 0 : i32
    return %c0_i32, %c0_i32_0 : i32, i32
  }
  func.func @transform_4(%arg0: i32) -> (i32, i32) {
    %c0_i32 = arith.constant 0 : i32
    %c0_i32_0 = arith.constant 0 : i32
    %c0_i32_1 = arith.constant 0 : i32
    return %c0_i32, %c0_i32_0 : i32, i32
  }
  func.func @transform_5(%arg0: i32) -> (i32, i32) {
    %c0_i32 = arith.constant 0 : i32
    %c0_i32_0 = arith.constant 0 : i32
    %c0_i32_1 = arith.constant 0 : i32
    return %c0_i32, %c0_i32_0 : i32, i32
  }
  func.func @transform_6(%arg0: i32) -> (i32, i32) {
    %c0_i32 = arith.constant 0 : i32
    %c0_i32_0 = arith.constant 0 : i32
    %c0_i32_1 = arith.constant 0 : i32
    return %c0_i32, %c0_i32_0 : i32, i32
  }
  func.func @transform_7(%arg0: i32) -> (i32, i32) {
    %c0_i32 = arith.constant 0 : i32
    %c0_i32_0 = arith.constant 0 : i32
    %c0_i32_1 = arith.constant 0 : i32
    return %c0_i32, %c0_i32_0 : i32, i32
  }
  func.func @transform_8(%arg0: i32) -> (i32, i32) {
    %c0_i32 = arith.constant 0 : i32
    %c0_i32_0 = arith.constant 0 : i32
    %c0_i32_1 = arith.constant 0 : i32
    return %c0_i32, %c0_i32_0 : i32, i32
  }
  func.func @transform_9(%arg0: i32) -> (i32, i32) {
    %c0_i32 = arith.constant 0 : i32
    %c0_i32_0 = arith.constant 0 : i32
    %c0_i32_1 = arith.constant 0 : i32
    return %c0_i32, %c0_i32_0 : i32, i32
  }
  func.func @transform_10(%arg0: i32) -> (i32, i32) {
    %c0_i32 = arith.constant 0 : i32
    %c0_i32_0 = arith.constant 0 : i32
    %c0_i32_1 = arith.constant 0 : i32
    return %c0_i32, %c0_i32_0 : i32, i32
  }
  func.func @transform_11(%arg0: i32) -> (i32, i32) {
    %c0_i32 = arith.constant 0 : i32
    %c0_i32_0 = arith.constant 0 : i32
    %c0_i32_1 = arith.constant 0 : i32
    return %c0_i32, %c0_i32_0 : i32, i32
  }
  func.func @transform_12(%arg0: i32) -> (i32, i32) {
    %c0_i32 = arith.constant 0 : i32
    %c0_i32_0 = arith.constant 0 : i32
    %c0_i32_1 = arith.constant 0 : i32
    return %c0_i32, %c0_i32_0 : i32, i32
  }
  func.func @transform_13(%arg0: i32) -> (i32, i32) {
    %c0_i32 = arith.constant 0 : i32
    %c0_i32_0 = arith.constant 0 : i32
    %c0_i32_1 = arith.constant 0 : i32
    return %c0_i32, %c0_i32_0 : i32, i32
  }
  func.func @transform_14(%arg0: i32) -> (i32, i32) {
    %c0_i32 = arith.constant 0 : i32
    %c0_i32_0 = arith.constant 0 : i32
    %c0_i32_1 = arith.constant 0 : i32
    return %c0_i32, %c0_i32_0 : i32, i32
  }
  func.func @transform_15(%arg0: i32) -> (i32, i32, i32) {
    %c0_i32 = arith.constant 0 : i32
    %c0_i32_0 = arith.constant 0 : i32
    %c0_i32_1 = arith.constant 0 : i32
    %c0_i32_2 = arith.constant 0 : i32
    return %c0_i32, %c0_i32_0, %c0_i32_1 : i32, i32, i32
  }
  func.func @transform_16(%arg0: i32) -> (i32, i32, i32) {
    %c0_i32 = arith.constant 0 : i32
    %c0_i32_0 = arith.constant 0 : i32
    %c0_i32_1 = arith.constant 0 : i32
    %c0_i32_2 = arith.constant 0 : i32
    return %c0_i32, %c0_i32_0, %c0_i32_1 : i32, i32, i32
  }
}

</mosaic_0001>

<llo_original>
// kernel: tpu_custom_call.1
$region0: #{tpu_custom_call.1}
  #allocation0 [shape = 'u32[]', space=smem, size = 0x4, offset = 0x4, fixed_abs, tag = 'smem constant byte address 0x4 - core index']
  #allocation1 [shape = 'u32[72,128]{1,0:T(1,128)}', space=vmem, size = 0x9000, scoped, tag = 'internal scratch']
  %s0 = inlined_call_operand.hbm [shape: f32[16,32], index: 0, kind: input, shape index: {}]
  %s1 = inlined_call_operand.hbm [shape: f32[16,48], index: 1, kind: input, shape index: {}]
  %s2 = inlined_call_operand.hbm [shape: f32[16,16], index: 2, kind: input, shape index: {}]
  %s3 = inlined_call_operand.hbm [shape: f32[16,16], index: 3, kind: input, shape index: {}]
  %s4 = inlined_call_operand.vmem [shape: f32[32,64], index: 4, kind: input, shape index: {}]
  %s5 = inlined_call_operand.vmem [shape: f32[32,64], index: 5, kind: input, shape index: {}]
  %s6 = inlined_call_operand.vmem [shape: f32[32,64], index: 6, kind: input, shape index: {}]
  %s7 = inlined_call_operand.vmem [shape: f32[64,32], index: 7, kind: input, shape index: {}]
  %s8 = inlined_call_operand.vmem [shape: f32[32,64], index: 8, kind: input, shape index: {}]
  %s9 = inlined_call_operand.vmem [shape: f32[48,64], index: 9, kind: input, shape index: {}]
  %s10 = inlined_call_operand.vmem [shape: f32[48,64], index: 10, kind: input, shape index: {}]
  %s11 = inlined_call_operand.vmem [shape: f32[64,32], index: 11, kind: input, shape index: {}]
  %s12 = inlined_call_operand.hbm [shape: f32[32,64], index: 12, kind: input, shape index: {}]
  %s13 = inlined_call_operand.vmem [shape: f32[64,32], index: 13, kind: input, shape index: {}]
  %s14 = inlined_call_operand.hbm [shape: f32[16,32], index: 14, kind: output, shape index: {0}]
  %s15 = inlined_call_operand.hbm [shape: f32[4,16,16], index: 15, kind: output, shape index: {1}]
  %s16 = inlined_call_operand.hbm [shape: f32[4,16,16], index: 16, kind: output, shape index: {2}]
  %17 = xla_tuple %s14, %s15, %s16
  %s18 = sld [smem:[#allocation0]]
  $region102: #{tpu_custom_call.1} parent=0
    _
  %s20 = ssub.s32 1, %s18
  %s21 = scalar_select 0, %s20, %s18
  $region1: #{tpu_custom_call.1} parent=0
    #allocation2 [shape = 'u8[8192]{0}', space=vmem, size = 0x2000, scoped, tag = 'input window, operand 0, single buffered']
    #allocation3 [shape = 's32[1]{0}', space=sflag, size = 0x4, scoped, tag = 'scoped memory for tpu_custom_call.1']
    #allocation4 [shape = 's32[1]{0}', space=sflag, size = 0x4, scoped, tag = 'scoped memory for tpu_custom_call.1']
    #allocation5 [shape = 'u8[8192]{0}', space=vmem, size = 0x2000, scoped, tag = 'input window, operand 1, single buffered']
    #allocation6 [shape = 's32[1]{0}', space=sflag, size = 0x4, scoped, tag = 'scoped memory for tpu_custom_call.1']
    #allocation7 [shape = 'u8[8192]{0}', space=vmem, size = 0x2000, scoped, tag = 'input window, operand 2, single buffered']
    #allocation8 [shape = 'u8[8192]{0}', space=vmem, size = 0x2000, scoped, tag = 'input window, operand 3, single buffered']
    #allocation9 [shape = 's32[1]{0}', space=sflag, size = 0x4, scoped, tag = 'scoped memory for tpu_custom_call.1']
    #allocation10 [shape = 'u8[16384]{0}', space=vmem, size = 0x4000, scoped, tag = 'input window, operand 12, single buffered']
    #allocation11 [shape = 'u8[8192]{0}', space=vmem, size = 0x2000, scoped, tag = 'output window, operand 0, single buffered']
    #allocation12 [shape = 'u8[32768]{0}', space=vmem, size = 0x8000, scoped, tag = 'output window, operand 1, single buffered']
    #allocation13 [shape = 's32[1]{0}', space=sflag, size = 0x4, scoped, tag = 'scoped memory for tpu_custom_call.1']
    #allocation14 [shape = 'u8[32768]{0}', space=vmem, size = 0x8000, scoped, tag = 'output window, operand 2, single buffered']
    %22 = vsyncpa [#allocation3], 0
    %23 = vsyncpa [#allocation6], 0
    %24 = vsyncpa [#allocation9], 0
    %25 = vsyncpa [#allocation4], 0
    %26 = vsyncpa [#allocation13], 0
    // Predicated region
    $region2: #{tpu_custom_call.1} parent=1 // pred_check
      _
    $region3: #{tpu_custom_call.1} parent=1 // pred_check_branch
      %28 = sbr.rel (0) target = $region5
    $region4: #{tpu_custom_call.1} parent=1 // pred_region
      %30 = vsyncadd [#allocation3], 0
      %s31 = sshll.u32 %s0, 4
      %s32 = int_to_ptr.hbm [resolvable:$true] %s31
      %s33 = sshll.u32 [#allocation2], 4
      %s34 = int_to_ptr.vmem [resolvable:$true] %s33
      %39 = dma.hbm_to_vmem [thread:$0]  %s32, 256, %s34, [#allocation3], 128, 128, 8
    $region5: #{tpu_custom_call.1} parent=1 // pred_fallthru
      _
    // Predicated region
    $region6: #{tpu_custom_call.1} parent=1 // pred_check
      _
    $region7: #{tpu_custom_call.1} parent=1 // pred_check_branch
      %41 = sbr.rel (0) target = $region9
    $region8: #{tpu_custom_call.1} parent=1 // pred_region
      %43 = vsyncadd [#allocation6], 0
      %s44 = sshll.u32 %s1, 4
      %s45 = int_to_ptr.hbm [resolvable:$true] %s44
      %s46 = sshll.u32 [#allocation5], 4
      %s47 = int_to_ptr.vmem [resolvable:$true] %s46
      %52 = dma.hbm_to_vmem [thread:$0]  %s45, 256, %s47, [#allocation6], 128, 128, 8
    $region9: #{tpu_custom_call.1} parent=1 // pred_fallthru
      _
    // Predicated region
    $region10: #{tpu_custom_call.1} parent=1 // pred_check
      _
    $region11: #{tpu_custom_call.1} parent=1 // pred_check_branch
      %54 = sbr.rel (0) target = $region13
    $region12: #{tpu_custom_call.1} parent=1 // pred_region
      %56 = vsyncadd [#allocation6], 0
      %s57 = sshll.u32 %s2, 4
      %s58 = int_to_ptr.hbm [resolvable:$true] %s57
      %s59 = sshll.u32 [#allocation7], 4
      %s60 = int_to_ptr.vmem [resolvable:$true] %s59
      %65 = dma.hbm_to_vmem [thread:$0]  %s58, 256, %s60, [#allocation6], 128, 128, 8
    $region13: #{tpu_custom_call.1} parent=1 // pred_fallthru
      _
    // Predicated region
    $region14: #{tpu_custom_call.1} parent=1 // pred_check
      _
    $region15: #{tpu_custom_call.1} parent=1 // pred_check_branch
      %67 = sbr.rel (0) target = $region17
    $region16: #{tpu_custom_call.1} parent=1 // pred_region
      %69 = vsyncadd [#allocation9], 0
      %s70 = sshll.u32 %s3, 4
      %s71 = int_to_ptr.hbm [resolvable:$true] %s70
      %s72 = sshll.u32 [#allocation8], 4
      %s73 = int_to_ptr.vmem [resolvable:$true] %s72
      %78 = dma.hbm_to_vmem [thread:$0]  %s71, 256, %s73, [#allocation9], 128, 128, 8
    $region17: #{tpu_custom_call.1} parent=1 // pred_fallthru
      _
    // Predicated region
    $region18: #{tpu_custom_call.1} parent=1 // pred_check
      _
    $region19: #{tpu_custom_call.1} parent=1 // pred_check_branch
      %80 = sbr.rel (0) target = $region21
    $region20: #{tpu_custom_call.1} parent=1 // pred_region
      _
    $region21: #{tpu_custom_call.1} parent=1 // pred_fallthru
      _
    // Predicated region
    $region22: #{tpu_custom_call.1} parent=1 // pred_check
      _
    $region23: #{tpu_custom_call.1} parent=1 // pred_check_branch
      %82 = sbr.rel (0) target = $region25
    $region24: #{tpu_custom_call.1} parent=1 // pred_region
      _
    $region25: #{tpu_custom_call.1} parent=1 // pred_fallthru
      _
    // Predicated region
    $region26: #{tpu_custom_call.1} parent=1 // pred_check
      _
    $region27: #{tpu_custom_call.1} parent=1 // pred_check_branch
      %84 = sbr.rel (0) target = $region29
    $region28: #{tpu_custom_call.1} parent=1 // pred_region
      _
    $region29: #{tpu_custom_call.1} parent=1 // pred_fallthru
      _
    // Predicated region
    $region30: #{tpu_custom_call.1} parent=1 // pred_check
      _
    $region31: #{tpu_custom_call.1} parent=1 // pred_check_branch
      %86 = sbr.rel (0) target = $region33
    $region32: #{tpu_custom_call.1} parent=1 // pred_region
      _
    $region33: #{tpu_custom_call.1} parent=1 // pred_fallthru
      _
    // Predicated region
    $region34: #{tpu_custom_call.1} parent=1 // pred_check
      _
    $region35: #{tpu_custom_call.1} parent=1 // pred_check_branch
      %88 = sbr.rel (0) target = $region37
    $region36: #{tpu_custom_call.1} parent=1 // pred_region
      _
    $region37: #{tpu_custom_call.1} parent=1 // pred_fallthru
      _
    // Predicated region
    $region38: #{tpu_custom_call.1} parent=1 // pred_check
      _
    $region39: #{tpu_custom_call.1} parent=1 // pred_check_branch
      %90 = sbr.rel (0) target = $region41
    $region40: #{tpu_custom_call.1} parent=1 // pred_region
      _
    $region41: #{tpu_custom_call.1} parent=1 // pred_fallthru
      _
    // Predicated region
    $region42: #{tpu_custom_call.1} parent=1 // pred_check
      _
    $region43: #{tpu_custom_call.1} parent=1 // pred_check_branch
      %92 = sbr.rel (0) target = $region45
    $region44: #{tpu_custom_call.1} parent=1 // pred_region
      _
    $region45: #{tpu_custom_call.1} parent=1 // pred_fallthru
      _
    // Predicated region
    $region46: #{tpu_custom_call.1} parent=1 // pred_check
      _
    $region47: #{tpu_custom_call.1} parent=1 // pred_check_branch
      %94 = sbr.rel (0) target = $region49
    $region48: #{tpu_custom_call.1} parent=1 // pred_region
      _
    $region49: #{tpu_custom_call.1} parent=1 // pred_fallthru
      _
    // Predicated region
    $region50: #{tpu_custom_call.1} parent=1 // pred_check
      _
    $region51: #{tpu_custom_call.1} parent=1 // pred_check_branch
      %96 = sbr.rel (0) target = $region53
    $region52: #{tpu_custom_call.1} parent=1 // pred_region
      %98 = vsyncadd [#allocation9], 0
      %s99 = sshll.u32 %s12, 4
      %s100 = int_to_ptr.hbm [resolvable:$true] %s99
      %s101 = sshll.u32 [#allocation10], 4
      %s102 = int_to_ptr.vmem [resolvable:$true] %s101
      %107 = dma.hbm_to_vmem [thread:$0]  %s100, 512, %s102, [#allocation9], 128, 128, 8
    $region53: #{tpu_custom_call.1} parent=1 // pred_fallthru
      _
    // Predicated region
    $region54: #{tpu_custom_call.1} parent=1 // pred_check
      _
    $region55: #{tpu_custom_call.1} parent=1 // pred_check_branch
      %109 = sbr.rel (0) target = $region57
    $region56: #{tpu_custom_call.1} parent=1 // pred_region
      _
    $region57: #{tpu_custom_call.1} parent=1 // pred_fallthru
      _
    // Predicated region
    $region58: #{tpu_custom_call.1} parent=1 // pred_check
      _
    $region59: #{tpu_custom_call.1} parent=1 // pred_check_branch
      %111 = sbr.rel (0) target = $region61
    $region60: #{tpu_custom_call.1} parent=1 // pred_region
      %113 = dma.done [#allocation3], 256
    $region61: #{tpu_custom_call.1} parent=1 // pred_fallthru
      _
    // Predicated region
    $region62: #{tpu_custom_call.1} parent=1 // pred_check
      _
    $region63: #{tpu_custom_call.1} parent=1 // pred_check_branch
      %115 = sbr.rel (0) target = $region65
    $region64: #{tpu_custom_call.1} parent=1 // pred_region
      %117 = dma.done [#allocation6], 256
    $region65: #{tpu_custom_call.1} parent=1 // pred_fallthru
      _
    // Predicated region
    $region66: #{tpu_custom_call.1} parent=1 // pred_check
      _
    $region67: #{tpu_custom_call.1} parent=1 // pred_check_branch
      %119 = sbr.rel (0) target = $region69
    $region68: #{tpu_custom_call.1} parent=1 // pred_region
      %121 = dma.done [#allocation6], 256
    $region69: #{tpu_custom_call.1} parent=1 // pred_fallthru
      _
    // Predicated region
    $region70: #{tpu_custom_call.1} parent=1 // pred_check
      _
    $region71: #{tpu_custom_call.1} parent=1 // pred_check_branch
      %123 = sbr.rel (0) target = $region73
    $region72: #{tpu_custom_call.1} parent=1 // pred_region
      %125 = dma.done [#allocation9], 256
    $region73: #{tpu_custom_call.1} parent=1 // pred_fallthru
      _
    // Predicated region
    $region74: #{tpu_custom_call.1} parent=1 // pred_check
      _
    $region75: #{tpu_custom_call.1} parent=1 // pred_check_branch
      %127 = sbr.rel (0) target = $region77
    $region76: #{tpu_custom_call.1} parent=1 // pred_region
      %129 = dma.done [#allocation9], 512
    $region77: #{tpu_custom_call.1} parent=1 // pred_fallthru
      _
    %v130 = vld [vmem:[#allocation2] sm:$0xff]
    %v131 = vld [vmem:[#allocation2 + $0x8] sm:$0xff]
    %v132 = vld [vmem:[#allocation5] sm:$0xff]
    %v133 = vld [vmem:[#allocation5 + $0x8] sm:$0xff]
    %v134 = vld [vmem:[%s4] sm:$0xff]
    %v135 = vld [vmem:[%s4 + $0x8] sm:$0xff]
    %v136 = vld [vmem:[%s4 + $0x10] sm:$0xff]
    %v137 = vld [vmem:[%s4 + $0x18] sm:$0xff]
    %v138 = vld [vmem:[%s5] sm:$0xff]
    %v139 = vld [vmem:[%s5 + $0x8] sm:$0xff]
    %v140 = vld [vmem:[%s5 + $0x10] sm:$0xff]
    %v141 = vld [vmem:[%s5 + $0x18] sm:$0xff]
    %v142 = vld [vmem:[%s6] sm:$0xff]
    %v143 = vld [vmem:[%s6 + $0x8] sm:$0xff]
    %v144 = vld [vmem:[%s6 + $0x10] sm:$0xff]
    %v145 = vld [vmem:[%s6 + $0x18] sm:$0xff]
    %v146 = vld [vmem:[%s7] sm:$0xff]
    %v147 = vld [vmem:[%s7 + $0x8] sm:$0xff]
    %v148 = vld [vmem:[%s7 + $0x10] sm:$0xff]
    %v149 = vld [vmem:[%s7 + $0x18] sm:$0xff]
    %v150 = vld [vmem:[%s7 + $0x20] sm:$0xff]
    %v151 = vld [vmem:[%s7 + $0x28] sm:$0xff]
    %v152 = vld [vmem:[%s7 + $0x30] sm:$0xff]
    %v153 = vld [vmem:[%s7 + $0x38] sm:$0xff]
    %v154 = vld [vmem:[#allocation7] sm:$0xff]
    %v155 = vld [vmem:[#allocation7 + $0x8] sm:$0xff]
    %vm156 = vcmask 261120
    %v158 = vsel %vm156, %v130, 0
    %v161 = vsel %vm156, %v131, 0
    %163 = vmatpush.msra.mxu0 0.0
    %164 = vmatpush.msra.mxu0 0.0
    %165 = vmatpush.msra.mxu0 0.0
    %166 = vmatpush.msra.mxu0 0.0
    %167 = vmatpush.msra.mxu0 0.0
    %168 = vmatpush.msra.mxu0 0.0
    %169 = vmatpush.msra.mxu0 0.0
    %170 = vmatpush.msra.mxu0 0.0
    %171 = vmatpush.msra.mxu0 0.0
    %172 = vmatpush.msra.mxu0 0.0
    %173 = vmatpush.msra.mxu0 0.0
    %174 = vmatpush.msra.mxu0 0.0
    %175 = vmatpush.msra.mxu0 %v137
    %176 = vmatpush.msra.mxu0 %v136
    %177 = vmatpush.msra.mxu0 %v135
    %178 = vmatpush.msra.mxu0 %v134
    %179 = vmatmul.f32.gmra.mxu0 %v158
    %v180 = vpop.f32.mrf.mxu0
    %v181 = vadd.f32 0.0, %v180
    %182 = vmatmul.f32.gmra.mxu0 %v161
    %v183 = vpop.f32.mrf.mxu0
    %v184 = vadd.f32 0.0, %v183
    %185 = vdwg.mxu0
    %186 = vmatpush.msra.mxu0 0.0
    %187 = vmatpush.msra.mxu0 0.0
    %188 = vmatpush.msra.mxu0 0.0
    %189 = vmatpush.msra.mxu0 0.0
    %190 = vmatpush.msra.mxu0 0.0
    %191 = vmatpush.msra.mxu0 0.0
    %192 = vmatpush.msra.mxu0 0.0
    %193 = vmatpush.msra.mxu0 0.0
    %194 = vmatpush.msra.mxu0 0.0
    %195 = vmatpush.msra.mxu0 0.0
    %196 = vmatpush.msra.mxu0 0.0
    %197 = vmatpush.msra.mxu0 0.0
    %198 = vmatpush.msra.mxu0 %v141
    %199 = vmatpush.msra.mxu0 %v140
    %200 = vmatpush.msra.mxu0 %v139
    %201 = vmatpush.msra.mxu0 %v138
    %202 = vmatmul.f32.gmra.mxu0 %v158
    %v203 = vpop.f32.mrf.mxu0
    %v204 = vadd.f32 0.0, %v203
    %205 = vmatmul.f32.gmra.mxu0 %v161
    %v206 = vpop.f32.mrf.mxu0
    %v207 = vadd.f32 0.0, %v206
    %208 = vdwg.mxu0
    %209 = vmatpush.msra.mxu0 0.0
    %210 = vmatpush.msra.mxu0 0.0
    %211 = vmatpush.msra.mxu0 0.0
    %212 = vmatpush.msra.mxu0 0.0
    %213 = vmatpush.msra.mxu0 0.0
    %214 = vmatpush.msra.mxu0 0.0
    %215 = vmatpush.msra.mxu0 0.0
    %216 = vmatpush.msra.mxu0 0.0
    %217 = vmatpush.msra.mxu0 0.0
    %218 = vmatpush.msra.mxu0 0.0
    %219 = vmatpush.msra.mxu0 0.0
    %220 = vmatpush.msra.mxu0 0.0
    %221 = vmatpush.msra.mxu0 %v145
    %222 = vmatpush.msra.mxu0 %v144
    %223 = vmatpush.msra.mxu0 %v143
    %224 = vmatpush.msra.mxu0 %v142
    %225 = vmatmul.f32.gmra.mxu0 %v158
    %v226 = vpop.f32.mrf.mxu0
    %v227 = vadd.f32 0.0, %v226
    %228 = vmatmul.f32.gmra.mxu0 %v161
    %v229 = vpop.f32.mrf.mxu0
    %v230 = vadd.f32 0.0, %v229
    %231 = vdwg.mxu0
    %vm232 = vcmask 130048
    %v234 = vsel %vm232, %v181, 0
    %v237 = vsel %vm232, %v184, 0
    %v240 = vsel %vm232, %v204, 0
    %v243 = vsel %vm232, %v207, 0
    %245 = vmatpush.xpose.msra.mxu0 0.0
    %246 = vmatpush.xpose.msra.mxu0 0.0
    %247 = vmatpush.xpose.msra.mxu0 0.0
    %248 = vmatpush.xpose.msra.mxu0 0.0
    %249 = vmatpush.xpose.msra.mxu0 0.0
    %250 = vmatpush.xpose.msra.mxu0 0.0
    %251 = vmatpush.xpose.msra.mxu0 0.0
    %252 = vmatpush.xpose.msra.mxu0 0.0
    %253 = vmatpush.xpose.msra.mxu0 0.0
    %254 = vmatpush.xpose.msra.mxu0 0.0
    %255 = vmatpush.xpose.msra.mxu0 0.0
    %256 = vmatpush.xpose.msra.mxu0 0.0
    %257 = vmatpush.xpose.msra.mxu0 0.0
    %258 = vmatpush.xpose.msra.mxu0 0.0
    %259 = vmatpush.xpose.msra.mxu0 %v243
    %260 = vmatpush.xpose.msra.mxu0 %v240
    %261 = vmatmul.f32.gmra.mxu0 %v234
    %v262 = vpop.f32.mrf.mxu0
    %v263 = vadd.f32 0.0, %v262
    %264 = vmatmul.f32.gmra.mxu0 %v237
    %v265 = vpop.f32.mrf.mxu0
    %v266 = vadd.f32 0.0, %v265
    %267 = vdwg.mxu0
    %v268 = vmul.f32 %v263, 0.25
    %v269 = vmul.f32 %v266, 0.25
    %v270 = vadd.f32 %v268, %v154
    %v271 = vadd.f32 %v269, %v155
    %v272 = vsel %vm232, %v270, -inf
    %273 = vmax.xlane.f32.xlu0 %v272
    %v274 = vpop.xlane.xlu0 %273
    %v275 = vsel %vm232, %v271, -inf
    %276 = vmax.xlane.f32.xlu0 %v275
    %v277 = vpop.xlane.xlu0 %276
    %v278 = vsub.f32 %v270, %v274
    %v279 = vsub.f32 %v271, %v277
    %v280 = vmul.f32 %v278, 1.442695
    %v281 = vpow.pop %v280
    %v282 = vmul.f32 %v279, 1.442695
    %v283 = vpow.pop %v282
    %v284 = vsel %vm232, %v281, 0.0
    %285 = vadd.xlane.f32.xlu0 %v284
    %v286 = vpop.xlane.xlu0 %285
    %v287 = vsel %vm232, %v283, 0.0
    %288 = vadd.xlane.f32.xlu0 %v287
    %v289 = vpop.xlane.xlu0 %288
    %v290 = vrcp.pop %v286
    %v291 = vmul.f32 %v286, %v290
    %v292 = vsub.f32 1.0, %v291
    %v293 = vmul.f32 %v290, %v292
    %v294 = vadd.f32 %v290, %v293
    %vm295 = vweird.f32 %v286
    %vm296 = vweird.f32 %v290
    %vm297 = vmor %vm295, %vm296
    %v298 = vsel %vm297, %v290, %v294
    %v299 = vand.u32 2147483647, %v286
    %vm300 = vcmp.eq.f32.partialorder %v299, 8.507059e+37
    %v301 = vand.u32 %v286, 2147483648
    %v302 = vor.u32 1.1754944e-38, %v301
    %v303 = vsel %vm300, %v302, %v298
    %v304 = vrcp.pop %v289
    %v305 = vmul.f32 %v289, %v304
    %v306 = vsub.f32 1.0, %v305
    %v307 = vmul.f32 %v304, %v306
    %v308 = vadd.f32 %v304, %v307
    %vm309 = vweird.f32 %v289
    %vm310 = vweird.f32 %v304
    %vm311 = vmor %vm309, %vm310
    %v312 = vsel %vm311, %v304, %v308
    %v313 = vand.u32 2147483647, %v289
    %vm314 = vcmp.eq.f32.partialorder %v313, 8.507059e+37
    %v315 = vand.u32 %v289, 2147483648
    %v316 = vor.u32 1.1754944e-38, %v315
    %v317 = vsel %vm314, %v316, %v312
    %v318 = vmul.f32 %v281, %v303
    %v319 = vmul.f32 %v283, %v317
    %320 = vst.msk [vmem:[#allocation12] sm:$0xff] %vm232, %v318
    %321 = vst.msk [vmem:[#allocation12 + $0x8] sm:$0xff] %vm232, %v319
    %v323 = vsel %vm232, %v318, 0
    %v326 = vsel %vm232, %v319, 0
    %328 = vmatpush.msra.mxu0 0.0
    %329 = vmatpush.msra.mxu0 0.0
    %330 = vmatpush.msra.mxu0 0.0
    %331 = vmatpush.msra.mxu0 0.0
    %332 = vmatpush.msra.mxu0 0.0
    %333 = vmatpush.msra.mxu0 0.0
    %334 = vmatpush.msra.mxu0 0.0
    %335 = vmatpush.msra.mxu0 0.0
    %336 = vmatpush.msra.mxu0 0.0
    %337 = vmatpush.msra.mxu0 0.0
    %338 = vmatpush.msra.mxu0 0.0
    %339 = vmatpush.msra.mxu0 0.0
    %340 = vmatpush.msra.mxu0 0.0
    %341 = vmatpush.msra.mxu0 0.0
    %342 = vmatpush.msra.mxu0 %v230
    %343 = vmatpush.msra.mxu0 %v227
    %344 = vmatmul.f32.gmra.mxu0 %v323
    %v345 = vpop.f32.mrf.mxu0
    %v346 = vadd.f32 0.0, %v345
    %347 = vmatmul.f32.gmra.mxu0 %v326
    %v348 = vpop.f32.mrf.mxu0
    %v349 = vadd.f32 0.0, %v348
    %350 = vdwg.mxu0
    %v352 = vsel %vm232, %v346, 0
    %v355 = vsel %vm232, %v349, 0
    %357 = vmatpush.msra.mxu0 0.0
    %358 = vmatpush.msra.mxu0 0.0
    %359 = vmatpush.msra.mxu0 0.0
    %360 = vmatpush.msra.mxu0 0.0
    %361 = vmatpush.msra.mxu0 0.0
    %362 = vmatpush.msra.mxu0 0.0
    %363 = vmatpush.msra.mxu0 0.0
    %364 = vmatpush.msra.mxu0 0.0
    %365 = vmatpush.msra.mxu0 0.0
    %366 = vmatpush.msra.mxu0 0.0
    %367 = vmatpush.msra.mxu0 0.0
    %368 = vmatpush.msra.mxu0 0.0
    %369 = vmatpush.msra.mxu0 0.0
    %370 = vmatpush.msra.mxu0 0.0
    %371 = vmatpush.msra.mxu0 %v147
    %372 = vmatpush.msra.mxu0 %v146
    %373 = vmatmul.f32.gmra.mxu0 %v352
    %v374 = vpop.f32.mrf.mxu0
    %v375 = vadd.f32 0.0, %v374
    %376 = vmatmul.f32.gmra.mxu0 %v355
    %v377 = vpop.f32.mrf.mxu0
    %v378 = vadd.f32 0.0, %v377
    %379 = vdwg.mxu0
    %v380 = vadd.f32 %v130, %v375
    %v381 = vadd.f32 %v131, %v378
    %382 = vrot.lane.b32.xlu0 %v181, 112
    %v383 = vpop.permute.xlu0 %382
    %384 = vrot.lane.b32.xlu0 %v184, 112
    %v385 = vpop.permute.xlu0 %384
    %386 = vrot.lane.b32.xlu0 %v204, 112
    %v387 = vpop.permute.xlu0 %386
    %388 = vrot.lane.b32.xlu0 %v207, 112
    %v389 = vpop.permute.xlu0 %388
    %v390 = vsel %vm232, %v383, 0
    %v392 = vsel %vm232, %v385, 0
    %v394 = vsel %vm232, %v387, 0
    %v396 = vsel %vm232, %v389, 0
    %398 = vmatpush.xpose.msra.mxu0 0.0
    %399 = vmatpush.xpose.msra.mxu0 0.0
    %400 = vmatpush.xpose.msra.mxu0 0.0
    %401 = vmatpush.xpose.msra.mxu0 0.0
    %402 = vmatpush.xpose.msra.mxu0 0.0
    %403 = vmatpush.xpose.msra.mxu0 0.0
    %404 = vmatpush.xpose.msra.mxu0 0.0
    %405 = vmatpush.xpose.msra.mxu0 0.0
    %406 = vmatpush.xpose.msra.mxu0 0.0
    %407 = vmatpush.xpose.msra.mxu0 0.0
    %408 = vmatpush.xpose.msra.mxu0 0.0
    %409 = vmatpush.xpose.msra.mxu0 0.0
    %410 = vmatpush.xpose.msra.mxu0 0.0
    %411 = vmatpush.xpose.msra.mxu0 0.0
    %412 = vmatpush.xpose.msra.mxu0 %v396
    %413 = vmatpush.xpose.msra.mxu0 %v394
    %414 = vmatmul.f32.gmra.mxu0 %v390
    %v415 = vpop.f32.mrf.mxu0
    %v416 = vadd.f32 0.0, %v415
    %417 = vmatmul.f32.gmra.mxu0 %v392
    %v418 = vpop.f32.mrf.mxu0
    %v419 = vadd.f32 0.0, %v418
    %420 = vdwg.mxu0
    %v421 = vmul.f32 %v416, 0.25
    %v422 = vmul.f32 %v419, 0.25
    %v423 = vadd.f32 %v421, %v154
    %v424 = vadd.f32 %v422, %v155
    %v425 = vsel %vm232, %v423, -inf
    %426 = vmax.xlane.f32.xlu0 %v425
    %v427 = vpop.xlane.xlu0 %426
    %v428 = vsel %vm232, %v424, -inf
    %429 = vmax.xlane.f32.xlu0 %v428
    %v430 = vpop.xlane.xlu0 %429
    %v431 = vsub.f32 %v423, %v427
    %v432 = vsub.f32 %v424, %v430
    %v433 = vmul.f32 %v431, 1.442695
    %v434 = vpow.pop %v433
    %v435 = vmul.f32 %v432, 1.442695
    %v436 = vpow.pop %v435
    %v437 = vsel %vm232, %v434, 0.0
    %438 = vadd.xlane.f32.xlu0 %v437
    %v439 = vpop.xlane.xlu0 %438
    %v440 = vsel %vm232, %v436, 0.0
    %441 = vadd.xlane.f32.xlu0 %v440
    %v442 = vpop.xlane.xlu0 %441
    %v443 = vrcp.pop %v439
    %v444 = vmul.f32 %v439, %v443
    %v445 = vsub.f32 1.0, %v444
    %v446 = vmul.f32 %v443, %v445
    %v447 = vadd.f32 %v443, %v446
    %vm448 = vweird.f32 %v439
    %vm449 = vweird.f32 %v443
    %vm450 = vmor %vm448, %vm449
    %v451 = vsel %vm450, %v443, %v447
    %v452 = vand.u32 2147483647, %v439
    %vm453 = vcmp.eq.f32.partialorder %v452, 8.507059e+37
    %v454 = vand.u32 %v439, 2147483648
    %v455 = vor.u32 1.1754944e-38, %v454
    %v456 = vsel %vm453, %v455, %v451
    %v457 = vrcp.pop %v442
    %v458 = vmul.f32 %v442, %v457
    %v459 = vsub.f32 1.0, %v458
    %v460 = vmul.f32 %v457, %v459
    %v461 = vadd.f32 %v457, %v460
    %vm462 = vweird.f32 %v442
    %vm463 = vweird.f32 %v457
    %vm464 = vmor %vm462, %vm463
    %v465 = vsel %vm464, %v457, %v461
    %v466 = vand.u32 2147483647, %v442
    %vm467 = vcmp.eq.f32.partialorder %v466, 8.507059e+37
    %v468 = vand.u32 %v442, 2147483648
    %v469 = vor.u32 1.1754944e-38, %v468
    %v470 = vsel %vm467, %v469, %v465
    %v471 = vmul.f32 %v434, %v456
    %v472 = vmul.f32 %v436, %v470
    %s473 = scalar_lea.vmem [#allocation12], 16
    %474 = vst.msk [vmem:[%s473] sm:$0xff] %vm232, %v471
    %475 = vst.msk [vmem:[%s473 + $0x8] sm:$0xff] %vm232, %v472
    %478 = vrot.lane.b32.xlu0 %v227, 112
    %v479 = vpop.permute.xlu0 %478
    %480 = vrot.lane.b32.xlu0 %v230, 112
    %v481 = vpop.permute.xlu0 %480
    %v485 = vsel %vm232, %v471, 0
    %v488 = vsel %vm232, %v472, 0
    %490 = vmatpush.msra.mxu0 0.0
    %491 = vmatpush.msra.mxu0 0.0
    %492 = vmatpush.msra.mxu0 0.0
    %493 = vmatpush.msra.mxu0 0.0
    %494 = vmatpush.msra.mxu0 0.0
    %495 = vmatpush.msra.mxu0 0.0
    %496 = vmatpush.msra.mxu0 0.0
    %497 = vmatpush.msra.mxu0 0.0
    %498 = vmatpush.msra.mxu0 0.0
    %499 = vmatpush.msra.mxu0 0.0
    %500 = vmatpush.msra.mxu0 0.0
    %501 = vmatpush.msra.mxu0 0.0
    %502 = vmatpush.msra.mxu0 0.0
    %503 = vmatpush.msra.mxu0 0.0
    %504 = vmatpush.msra.mxu0 %v481
    %505 = vmatpush.msra.mxu0 %v479
    %506 = vmatmul.f32.gmra.mxu0 %v485
    %v507 = vpop.f32.mrf.mxu0
    %v508 = vadd.f32 0.0, %v507
    %509 = vmatmul.f32.gmra.mxu0 %v488
    %v510 = vpop.f32.mrf.mxu0
    %v511 = vadd.f32 0.0, %v510
    %512 = vdwg.mxu0
    %v514 = vsel %vm232, %v508, 0
    %v517 = vsel %vm232, %v511, 0
    %519 = vmatpush.msra.mxu0 0.0
    %520 = vmatpush.msra.mxu0 0.0
    %521 = vmatpush.msra.mxu0 0.0
    %522 = vmatpush.msra.mxu0 0.0
    %523 = vmatpush.msra.mxu0 0.0
    %524 = vmatpush.msra.mxu0 0.0
    %525 = vmatpush.msra.mxu0 0.0
    %526 = vmatpush.msra.mxu0 0.0
    %527 = vmatpush.msra.mxu0 0.0
    %528 = vmatpush.msra.mxu0 0.0
    %529 = vmatpush.msra.mxu0 0.0
    %530 = vmatpush.msra.mxu0 0.0
    %531 = vmatpush.msra.mxu0 0.0
    %532 = vmatpush.msra.mxu0 0.0
    %533 = vmatpush.msra.mxu0 %v149
    %534 = vmatpush.msra.mxu0 %v148
    %535 = vmatmul.f32.gmra.mxu0 %v514
    %v536 = vpop.f32.mrf.mxu0
    %v537 = vadd.f32 0.0, %v536
    %538 = vmatmul.f32.gmra.mxu0 %v517
    %v539 = vpop.f32.mrf.mxu0
    %v540 = vadd.f32 0.0, %v539
    %541 = vdwg.mxu0
    %v542 = vadd.f32 %v380, %v537
    %v543 = vadd.f32 %v381, %v540
    %544 = vrot.lane.b32.xlu0 %v181, 96
    %v545 = vpop.permute.xlu0 %544
    %546 = vrot.lane.b32.xlu0 %v184, 96
    %v547 = vpop.permute.xlu0 %546
    %548 = vrot.lane.b32.xlu0 %v204, 96
    %v549 = vpop.permute.xlu0 %548
    %550 = vrot.lane.b32.xlu0 %v207, 96
    %v551 = vpop.permute.xlu0 %550
    %v552 = vsel %vm232, %v545, 0
    %v554 = vsel %vm232, %v547, 0
    %v556 = vsel %vm232, %v549, 0
    %v558 = vsel %vm232, %v551, 0
    %560 = vmatpush.xpose.msra.mxu0 0.0
    %561 = vmatpush.xpose.msra.mxu0 0.0
    %562 = vmatpush.xpose.msra.mxu0 0.0
    %563 = vmatpush.xpose.msra.mxu0 0.0
    %564 = vmatpush.xpose.msra.mxu0 0.0
    %565 = vmatpush.xpose.msra.mxu0 0.0
    %566 = vmatpush.xpose.msra.mxu0 0.0
    %567 = vmatpush.xpose.msra.mxu0 0.0
    %568 = vmatpush.xpose.msra.mxu0 0.0
    %569 = vmatpush.xpose.msra.mxu0 0.0
    %570 = vmatpush.xpose.msra.mxu0 0.0
    %571 = vmatpush.xpose.msra.mxu0 0.0
    %572 = vmatpush.xpose.msra.mxu0 0.0
    %573 = vmatpush.xpose.msra.mxu0 0.0
    %574 = vmatpush.xpose.msra.mxu0 %v558
    %575 = vmatpush.xpose.msra.mxu0 %v556
    %576 = vmatmul.f32.gmra.mxu0 %v552
    %v577 = vpop.f32.mrf.mxu0
    %v578 = vadd.f32 0.0, %v577
    %579 = vmatmul.f32.gmra.mxu0 %v554
    %v580 = vpop.f32.mrf.mxu0
    %v581 = vadd.f32 0.0, %v580
    %582 = vdwg.mxu0
    %v583 = vmul.f32 %v578, 0.25
    %v584 = vmul.f32 %v581, 0.25
    %v585 = vadd.f32 %v583, %v154
    %v586 = vadd.f32 %v584, %v155
    %v587 = vsel %vm232, %v585, -inf
    %588 = vmax.xlane.f32.xlu0 %v587
    %v589 = vpop.xlane.xlu0 %588
    %v590 = vsel %vm232, %v586, -inf
    %591 = vmax.xlane.f32.xlu0 %v590
    %v592 = vpop.xlane.xlu0 %591
    %v593 = vsub.f32 %v585, %v589
    %v594 = vsub.f32 %v586, %v592
    %v595 = vmul.f32 %v593, 1.442695
    %v596 = vpow.pop %v595
    %v597 = vmul.f32 %v594, 1.442695
    %v598 = vpow.pop %v597
    %v599 = vsel %vm232, %v596, 0.0
    %600 = vadd.xlane.f32.xlu0 %v599
    %v601 = vpop.xlane.xlu0 %600
    %v602 = vsel %vm232, %v598, 0.0
    %603 = vadd.xlane.f32.xlu0 %v602
    %v604 = vpop.xlane.xlu0 %603
    %v605 = vrcp.pop %v601
    %v606 = vmul.f32 %v601, %v605
    %v607 = vsub.f32 1.0, %v606
    %v608 = vmul.f32 %v605, %v607
    %v609 = vadd.f32 %v605, %v608
    %vm610 = vweird.f32 %v601
    %vm611 = vweird.f32 %v605
    %vm612 = vmor %vm610, %vm611
    %v613 = vsel %vm612, %v605, %v609
    %v614 = vand.u32 2147483647, %v601
    %vm615 = vcmp.eq.f32.partialorder %v614, 8.507059e+37
    %v616 = vand.u32 %v601, 2147483648
    %v617 = vor.u32 1.1754944e-38, %v616
    %v618 = vsel %vm615, %v617, %v613
    %v619 = vrcp.pop %v604
    %v620 = vmul.f32 %v604, %v619
    %v621 = vsub.f32 1.0, %v620
    %v622 = vmul.f32 %v619, %v621
    %v623 = vadd.f32 %v619, %v622
    %vm624 = vweird.f32 %v604
    %vm625 = vweird.f32 %v619
    %vm626 = vmor %vm624, %vm625
    %v627 = vsel %vm626, %v619, %v623
    %v628 = vand.u32 2147483647, %v604
    %vm629 = vcmp.eq.f32.partialorder %v628, 8.507059e+37
    %v630 = vand.u32 %v604, 2147483648
    %v631 = vor.u32 1.1754944e-38, %v630
    %v632 = vsel %vm629, %v631, %v627
    %v633 = vmul.f32 %v596, %v618
    %v634 = vmul.f32 %v598, %v632
    %s635 = scalar_lea.vmem [#allocation12], 32
    %636 = vst.msk [vmem:[%s635] sm:$0xff] %vm232, %v633
    %637 = vst.msk [vmem:[%s635 + $0x8] sm:$0xff] %vm232, %v634
    %638 = vrot.lane.b32.xlu0 %v227, 96
    %v639 = vpop.permute.xlu0 %638
    %640 = vrot.lane.b32.xlu0 %v230, 96
    %v641 = vpop.permute.xlu0 %640
    %v645 = vsel %vm232, %v633, 0
    %v648 = vsel %vm232, %v634, 0
    %650 = vmatpush.msra.mxu0 0.0
    %651 = vmatpush.msra.mxu0 0.0
    %652 = vmatpush.msra.mxu0 0.0
    %653 = vmatpush.msra.mxu0 0.0
    %654 = vmatpush.msra.mxu0 0.0
    %655 = vmatpush.msra.mxu0 0.0
    %656 = vmatpush.msra.mxu0 0.0
    %657 = vmatpush.msra.mxu0 0.0
    %658 = vmatpush.msra.mxu0 0.0
    %659 = vmatpush.msra.mxu0 0.0
    %660 = vmatpush.msra.mxu0 0.0
    %661 = vmatpush.msra.mxu0 0.0
    %662 = vmatpush.msra.mxu0 0.0
    %663 = vmatpush.msra.mxu0 0.0
    %664 = vmatpush.msra.mxu0 %v641
    %665 = vmatpush.msra.mxu0 %v639
    %666 = vmatmul.f32.gmra.mxu0 %v645
    %v667 = vpop.f32.mrf.mxu0
    %v668 = vadd.f32 0.0, %v667
    %669 = vmatmul.f32.gmra.mxu0 %v648
    %v670 = vpop.f32.mrf.mxu0
    %v671 = vadd.f32 0.0, %v670
    %672 = vdwg.mxu0
    %v674 = vsel %vm232, %v668, 0
    %v677 = vsel %vm232, %v671, 0
    %679 = vmatpush.msra.mxu0 0.0
    %680 = vmatpush.msra.mxu0 0.0
    %681 = vmatpush.msra.mxu0 0.0
    %682 = vmatpush.msra.mxu0 0.0
    %683 = vmatpush.msra.mxu0 0.0
    %684 = vmatpush.msra.mxu0 0.0
    %685 = vmatpush.msra.mxu0 0.0
    %686 = vmatpush.msra.mxu0 0.0
    %687 = vmatpush.msra.mxu0 0.0
    %688 = vmatpush.msra.mxu0 0.0
    %689 = vmatpush.msra.mxu0 0.0
    %690 = vmatpush.msra.mxu0 0.0
    %691 = vmatpush.msra.mxu0 0.0
    %692 = vmatpush.msra.mxu0 0.0
    %693 = vmatpush.msra.mxu0 %v151
    %694 = vmatpush.msra.mxu0 %v150
    %695 = vmatmul.f32.gmra.mxu0 %v674
    %v696 = vpop.f32.mrf.mxu0
    %v697 = vadd.f32 0.0, %v696
    %698 = vmatmul.f32.gmra.mxu0 %v677
    %v699 = vpop.f32.mrf.mxu0
    %v700 = vadd.f32 0.0, %v699
    %701 = vdwg.mxu0
    %v702 = vadd.f32 %v542, %v697
    %v703 = vadd.f32 %v543, %v700
    %704 = vrot.lane.b32.xlu0 %v181, 80
    %v705 = vpop.permute.xlu0 %704
    %706 = vrot.lane.b32.xlu0 %v184, 80
    %v707 = vpop.permute.xlu0 %706
    %708 = vrot.lane.b32.xlu0 %v204, 80
    %v709 = vpop.permute.xlu0 %708
    %710 = vrot.lane.b32.xlu0 %v207, 80
    %v711 = vpop.permute.xlu0 %710
    %v712 = vsel %vm232, %v705, 0
    %v714 = vsel %vm232, %v707, 0
    %v716 = vsel %vm232, %v709, 0
    %v718 = vsel %vm232, %v711, 0
    %720 = vmatpush.xpose.msra.mxu0 0.0
    %721 = vmatpush.xpose.msra.mxu0 0.0
    %722 = vmatpush.xpose.msra.mxu0 0.0
    %723 = vmatpush.xpose.msra.mxu0 0.0
    %724 = vmatpush.xpose.msra.mxu0 0.0
    %725 = vmatpush.xpose.msra.mxu0 0.0
    %726 = vmatpush.xpose.msra.mxu0 0.0
    %727 = vmatpush.xpose.msra.mxu0 0.0
    %728 = vmatpush.xpose.msra.mxu0 0.0
    %729 = vmatpush.xpose.msra.mxu0 0.0
    %730 = vmatpush.xpose.msra.mxu0 0.0
    %731 = vmatpush.xpose.msra.mxu0 0.0
    %732 = vmatpush.xpose.msra.mxu0 0.0
    %733 = vmatpush.xpose.msra.mxu0 0.0
    %734 = vmatpush.xpose.msra.mxu0 %v718
    %735 = vmatpush.xpose.msra.mxu0 %v716
    %736 = vmatmul.f32.gmra.mxu0 %v712
    %v737 = vpop.f32.mrf.mxu0
    %v738 = vadd.f32 0.0, %v737
    %739 = vmatmul.f32.gmra.mxu0 %v714
    %v740 = vpop.f32.mrf.mxu0
    %v741 = vadd.f32 0.0, %v740
    %742 = vdwg.mxu0
    %v743 = vmul.f32 %v738, 0.25
    %v744 = vmul.f32 %v741, 0.25
    %v745 = vadd.f32 %v743, %v154
    %v746 = vadd.f32 %v744, %v155
    %v747 = vsel %vm232, %v745, -inf
    %748 = vmax.xlane.f32.xlu0 %v747
    %v749 = vpop.xlane.xlu0 %748
    %v750 = vsel %vm232, %v746, -inf
    %751 = vmax.xlane.f32.xlu0 %v750
    %v752 = vpop.xlane.xlu0 %751
    %v753 = vsub.f32 %v745, %v749
    %v754 = vsub.f32 %v746, %v752
    %v755 = vmul.f32 %v753, 1.442695
    %v756 = vpow.pop %v755
    %v757 = vmul.f32 %v754, 1.442695
    %v758 = vpow.pop %v757
    %v759 = vsel %vm232, %v756, 0.0
    %760 = vadd.xlane.f32.xlu0 %v759
    %v761 = vpop.xlane.xlu0 %760
    %v762 = vsel %vm232, %v758, 0.0
    %763 = vadd.xlane.f32.xlu0 %v762
    %v764 = vpop.xlane.xlu0 %763
    %v765 = vrcp.pop %v761
    %v766 = vmul.f32 %v761, %v765
    %v767 = vsub.f32 1.0, %v766
    %v768 = vmul.f32 %v765, %v767
    %v769 = vadd.f32 %v765, %v768
    %vm770 = vweird.f32 %v761
    %vm771 = vweird.f32 %v765
    %vm772 = vmor %vm770, %vm771
    %v773 = vsel %vm772, %v765, %v769
    %v774 = vand.u32 2147483647, %v761
    %vm775 = vcmp.eq.f32.partialorder %v774, 8.507059e+37
    %v776 = vand.u32 %v761, 2147483648
    %v777 = vor.u32 1.1754944e-38, %v776
    %v778 = vsel %vm775, %v777, %v773
    %v779 = vrcp.pop %v764
    %v780 = vmul.f32 %v764, %v779
    %v781 = vsub.f32 1.0, %v780
    %v782 = vmul.f32 %v779, %v781
    %v783 = vadd.f32 %v779, %v782
    %vm784 = vweird.f32 %v764
    %vm785 = vweird.f32 %v779
    %vm786 = vmor %vm784, %vm785
    %v787 = vsel %vm786, %v779, %v783
    %v788 = vand.u32 2147483647, %v764
    %vm789 = vcmp.eq.f32.partialorder %v788, 8.507059e+37
    %v790 = vand.u32 %v764, 2147483648
    %v791 = vor.u32 1.1754944e-38, %v790
    %v792 = vsel %vm789, %v791, %v787
    %v793 = vmul.f32 %v756, %v778
    %v794 = vmul.f32 %v758, %v792
    %s795 = scalar_lea.vmem [#allocation12], 48
    %796 = vst.msk [vmem:[%s795] sm:$0xff] %vm232, %v793
    %797 = vst.msk [vmem:[%s795 + $0x8] sm:$0xff] %vm232, %v794
    %798 = vrot.lane.b32.xlu0 %v227, 80
    %v799 = vpop.permute.xlu0 %798
    %800 = vrot.lane.b32.xlu0 %v230, 80
    %v801 = vpop.permute.xlu0 %800
    %v805 = vsel %vm232, %v793, 0
    %v808 = vsel %vm232, %v794, 0
    %810 = vmatpush.msra.mxu0 0.0
    %811 = vmatpush.msra.mxu0 0.0
    %812 = vmatpush.msra.mxu0 0.0
    %813 = vmatpush.msra.mxu0 0.0
    %814 = vmatpush.msra.mxu0 0.0
    %815 = vmatpush.msra.mxu0 0.0
    %816 = vmatpush.msra.mxu0 0.0
    %817 = vmatpush.msra.mxu0 0.0
    %818 = vmatpush.msra.mxu0 0.0
    %819 = vmatpush.msra.mxu0 0.0
    %820 = vmatpush.msra.mxu0 0.0
    %821 = vmatpush.msra.mxu0 0.0
    %822 = vmatpush.msra.mxu0 0.0
    %823 = vmatpush.msra.mxu0 0.0
    %824 = vmatpush.msra.mxu0 %v801
    %825 = vmatpush.msra.mxu0 %v799
    %826 = vmatmul.f32.gmra.mxu0 %v805
    %v827 = vpop.f32.mrf.mxu0
    %v828 = vadd.f32 0.0, %v827
    %829 = vmatmul.f32.gmra.mxu0 %v808
    %v830 = vpop.f32.mrf.mxu0
    %v831 = vadd.f32 0.0, %v830
    %832 = vdwg.mxu0
    %v834 = vsel %vm232, %v828, 0
    %v837 = vsel %vm232, %v831, 0
    %839 = vmatpush.msra.mxu0 0.0
    %840 = vmatpush.msra.mxu0 0.0
    %841 = vmatpush.msra.mxu0 0.0
    %842 = vmatpush.msra.mxu0 0.0
    %843 = vmatpush.msra.mxu0 0.0
    %844 = vmatpush.msra.mxu0 0.0
    %845 = vmatpush.msra.mxu0 0.0
    %846 = vmatpush.msra.mxu0 0.0
    %847 = vmatpush.msra.mxu0 0.0
    %848 = vmatpush.msra.mxu0 0.0
    %849 = vmatpush.msra.mxu0 0.0
    %850 = vmatpush.msra.mxu0 0.0
    %851 = vmatpush.msra.mxu0 0.0
    %852 = vmatpush.msra.mxu0 0.0
    %853 = vmatpush.msra.mxu0 %v153
    %854 = vmatpush.msra.mxu0 %v152
    %855 = vmatmul.f32.gmra.mxu0 %v834
    %v856 = vpop.f32.mrf.mxu0
    %v857 = vadd.f32 0.0, %v856
    %858 = vmatmul.f32.gmra.mxu0 %v837
    %v859 = vpop.f32.mrf.mxu0
    %v860 = vadd.f32 0.0, %v859
    %861 = vdwg.mxu0
    %v862 = vadd.f32 %v702, %v857
    %v863 = vadd.f32 %v703, %v860
    %v864 = vsel %vm156, %v862, 0.0
    %865 = vadd.xlane.f32.xlu0 %v864
    %v866 = vpop.xlane.xlu0 %865
    %v867 = vsel %vm156, %v863, 0.0
    %868 = vadd.xlane.f32.xlu0 %v867
    %v869 = vpop.xlane.xlu0 %868
    %v870 = vrcp.pop 32.0
    %v871 = vmul.f32 32.0, %v870
    %v872 = vsub.f32 1.0, %v871
    %v873 = vmul.f32 %v870, %v872
    %v874 = vadd.f32 %v870, %v873
    %vm875 = vweird.f32 %v870
    %v876 = vsel %vm875, %v870, %v874
    %v877 = vmul.f32 %v866, %v876
    %v878 = vmul.f32 %v869, %v876
    %v879 = vsub.f32 %v862, %v877
    %v880 = vsub.f32 %v863, %v878
    %v881 = vmul.f32 %v879, %v879
    %v882 = vmul.f32 %v880, %v880
    %v883 = vsel %vm156, %v881, 0.0
    %884 = vadd.xlane.f32.xlu0 %v883
    %v885 = vpop.xlane.xlu0 %884
    %v886 = vsel %vm156, %v882, 0.0
    %887 = vadd.xlane.f32.xlu0 %v886
    %v888 = vpop.xlane.xlu0 %887
    %v889 = vmul.f32 %v885, %v876
    %v890 = vmul.f32 %v888, %v876
    %v891 = vadd.f32 %v889, 1e-05
    %v892 = vadd.f32 %v890, 1e-05
    %v893 = vrsqrt.pop %v891
    %v894 = vmul.f32 %v893, %v891
    %v895 = vmul.f32 %v894, %v893
    %v896 = vmul.f32 0.5, %v895
    %v897 = vsub.f32 1.5, %v896
    %v898 = vmul.f32 %v893, %v897
    %vm899 = vweird.f32 %v891
    %vm900 = vweird.f32 %v893
    %vm901 = vmor %vm899, %vm900
    %v902 = vsel %vm901, %v893, %v898
    %v903 = vrsqrt.pop %v892
    %v904 = vmul.f32 %v903, %v892
    %v905 = vmul.f32 %v904, %v903
    %v906 = vmul.f32 0.5, %v905
    %v907 = vsub.f32 1.5, %v906
    %v908 = vmul.f32 %v903, %v907
    %vm909 = vweird.f32 %v892
    %vm910 = vweird.f32 %v903
    %vm911 = vmor %vm909, %vm910
    %v912 = vsel %vm911, %v903, %v908
    %v913 = vmul.f32 %v879, %v902
    %v914 = vmul.f32 %v880, %v912
    %v915 = vld [vmem:[%s8] sm:$0xff]
    %v916 = vld [vmem:[%s8 + $0x8] sm:$0xff]
    %v917 = vld [vmem:[%s8 + $0x10] sm:$0xff]
    %v918 = vld [vmem:[%s8 + $0x18] sm:$0xff]
    %v919 = vld [vmem:[%s9] sm:$0xff]
    %v920 = vld [vmem:[%s9 + $0x8] sm:$0xff]
    %v921 = vld [vmem:[%s9 + $0x10] sm:$0xff]
    %v922 = vld [vmem:[%s9 + $0x18] sm:$0xff]
    %v923 = vld [vmem:[%s9 + $0x20] sm:$0xff]
    %v924 = vld [vmem:[%s9 + $0x28] sm:$0xff]
    %v925 = vld [vmem:[%s10] sm:$0xff]
    %v926 = vld [vmem:[%s10 + $0x8] sm:$0xff]
    %v927 = vld [vmem:[%s10 + $0x10] sm:$0xff]
    %v928 = vld [vmem:[%s10 + $0x18] sm:$0xff]
    %v929 = vld [vmem:[%s10 + $0x20] sm:$0xff]
    %v930 = vld [vmem:[%s10 + $0x28] sm:$0xff]
    %v931 = vld [vmem:[%s11] sm:$0xff]
    %v932 = vld [vmem:[%s11 + $0x8] sm:$0xff]
    %v933 = vld [vmem:[%s11 + $0x10] sm:$0xff]
    %v934 = vld [vmem:[%s11 + $0x18] sm:$0xff]
    %v935 = vld [vmem:[%s11 + $0x20] sm:$0xff]
    %v936 = vld [vmem:[%s11 + $0x28] sm:$0xff]
    %v937 = vld [vmem:[%s11 + $0x30] sm:$0xff]
    %v938 = vld [vmem:[%s11 + $0x38] sm:$0xff]
    %v939 = vld [vmem:[#allocation8] sm:$0xff]
    %v940 = vld [vmem:[#allocation8 + $0x8] sm:$0xff]
    %v942 = vsel %vm156, %v913, 0
    %v945 = vsel %vm156, %v914, 0
    %947 = vmatpush.msra.mxu0 0.0
    %948 = vmatpush.msra.mxu0 0.0
    %949 = vmatpush.msra.mxu0 0.0
    %950 = vmatpush.msra.mxu0 0.0
    %951 = vmatpush.msra.mxu0 0.0
    %952 = vmatpush.msra.mxu0 0.0
    %953 = vmatpush.msra.mxu0 0.0
    %954 = vmatpush.msra.mxu0 0.0
    %955 = vmatpush.msra.mxu0 0.0
    %956 = vmatpush.msra.mxu0 0.0
    %957 = vmatpush.msra.mxu0 0.0
    %958 = vmatpush.msra.mxu0 0.0
    %959 = vmatpush.msra.mxu0 %v918
    %960 = vmatpush.msra.mxu0 %v917
    %961 = vmatpush.msra.mxu0 %v916
    %962 = vmatpush.msra.mxu0 %v915
    %963 = vmatmul.f32.gmra.mxu0 %v942
    %v964 = vpop.f32.mrf.mxu0
    %v965 = vadd.f32 0.0, %v964
    %966 = vmatmul.f32.gmra.mxu0 %v945
    %v967 = vpop.f32.mrf.mxu0
    %v968 = vadd.f32 0.0, %v967
    %969 = vdwg.mxu0
    %vm970 = vcmask 392192
    %v972 = vsel %vm970, %v132, 0
    %v975 = vsel %vm970, %v133, 0
    %977 = vmatpush.msra.mxu0 0.0
    %978 = vmatpush.msra.mxu0 0.0
    %979 = vmatpush.msra.mxu0 0.0
    %980 = vmatpush.msra.mxu0 0.0
    %981 = vmatpush.msra.mxu0 0.0
    %982 = vmatpush.msra.mxu0 0.0
    %983 = vmatpush.msra.mxu0 0.0
    %984 = vmatpush.msra.mxu0 0.0
    %985 = vmatpush.msra.mxu0 0.0
    %986 = vmatpush.msra.mxu0 0.0
    %987 = vmatpush.msra.mxu0 %v924
    %988 = vmatpush.msra.mxu0 %v923
    %989 = vmatpush.msra.mxu0 %v922
    %990 = vmatpush.msra.mxu0 %v921
    %991 = vmatpush.msra.mxu0 %v920
    %992 = vmatpush.msra.mxu0 %v919
    %993 = vmatmul.f32.gmra.mxu0 %v972
    %v994 = vpop.f32.mrf.mxu0
    %v995 = vadd.f32 0.0, %v994
    %996 = vmatmul.f32.gmra.mxu0 %v975
    %v997 = vpop.f32.mrf.mxu0
    %v998 = vadd.f32 0.0, %v997
    %999 = vdwg.mxu0
    %1000 = vmatpush.msra.mxu0 0.0
    %1001 = vmatpush.msra.mxu0 0.0
    %1002 = vmatpush.msra.mxu0 0.0
    %1003 = vmatpush.msra.mxu0 0.0
    %1004 = vmatpush.msra.mxu0 0.0
    %1005 = vmatpush.msra.mxu0 0.0
    %1006 = vmatpush.msra.mxu0 0.0
    %1007 = vmatpush.msra.mxu0 0.0
    %1008 = vmatpush.msra.mxu0 0.0
    %1009 = vmatpush.msra.mxu0 0.0
    %1010 = vmatpush.msra.mxu0 %v930
    %1011 = vmatpush.msra.mxu0 %v929
    %1012 = vmatpush.msra.mxu0 %v928
    %1013 = vmatpush.msra.mxu0 %v927
    %1014 = vmatpush.msra.mxu0 %v926
    %1015 = vmatpush.msra.mxu0 %v925
    %1016 = vmatmul.f32.gmra.mxu0 %v972
    %v1017 = vpop.f32.mrf.mxu0
    %v1018 = vadd.f32 0.0, %v1017
    %1019 = vmatmul.f32.gmra.mxu0 %v975
    %v1020 = vpop.f32.mrf.mxu0
    %v1021 = vadd.f32 0.0, %v1020
    %1022 = vdwg.mxu0
    %v1024 = vsel %vm232, %v965, 0
    %v1027 = vsel %vm232, %v968, 0
    %v1030 = vsel %vm232, %v995, 0
    %v1033 = vsel %vm232, %v998, 0
    %1035 = vmatpush.xpose.msra.mxu0 0.0
    %1036 = vmatpush.xpose.msra.mxu0 0.0
    %1037 = vmatpush.xpose.msra.mxu0 0.0
    %1038 = vmatpush.xpose.msra.mxu0 0.0
    %1039 = vmatpush.xpose.msra.mxu0 0.0
    %1040 = vmatpush.xpose.msra.mxu0 0.0
    %1041 = vmatpush.xpose.msra.mxu0 0.0
    %1042 = vmatpush.xpose.msra.mxu0 0.0
    %1043 = vmatpush.xpose.msra.mxu0 0.0
    %1044 = vmatpush.xpose.msra.mxu0 0.0
    %1045 = vmatpush.xpose.msra.mxu0 0.0
    %1046 = vmatpush.xpose.msra.mxu0 0.0
    %1047 = vmatpush.xpose.msra.mxu0 0.0
    %1048 = vmatpush.xpose.msra.mxu0 0.0
    %1049 = vmatpush.xpose.msra.mxu0 %v1033
    %1050 = vmatpush.xpose.msra.mxu0 %v1030
    %1051 = vmatmul.f32.gmra.mxu0 %v1024
    %v1052 = vpop.f32.mrf.mxu0
    %v1053 = vadd.f32 0.0, %v1052
    %1054 = vmatmul.f32.gmra.mxu0 %v1027
    %v1055 = vpop.f32.mrf.mxu0
    %v1056 = vadd.f32 0.0, %v1055
    %1057 = vdwg.mxu0
    %v1058 = vmul.f32 %v1053, 0.25
    %v1059 = vmul.f32 %v1056, 0.25
    %v1060 = vadd.f32 %v1058, %v939
    %v1061 = vadd.f32 %v1059, %v940
    %v1062 = vsel %vm232, %v1060, -inf
    %1063 = vmax.xlane.f32.xlu0 %v1062
    %v1064 = vpop.xlane.xlu0 %1063
    %v1065 = vsel %vm232, %v1061, -inf
    %1066 = vmax.xlane.f32.xlu0 %v1065
    %v1067 = vpop.xlane.xlu0 %1066
    %v1068 = vsub.f32 %v1060, %v1064
    %v1069 = vsub.f32 %v1061, %v1067
    %v1070 = vmul.f32 %v1068, 1.442695
    %v1071 = vpow.pop %v1070
    %v1072 = vmul.f32 %v1069, 1.442695
    %v1073 = vpow.pop %v1072
    %v1074 = vsel %vm232, %v1071, 0.0
    %1075 = vadd.xlane.f32.xlu0 %v1074
    %v1076 = vpop.xlane.xlu0 %1075
    %v1077 = vsel %vm232, %v1073, 0.0
    %1078 = vadd.xlane.f32.xlu0 %v1077
    %v1079 = vpop.xlane.xlu0 %1078
    %v1080 = vrcp.pop %v1076
    %v1081 = vmul.f32 %v1076, %v1080
    %v1082 = vsub.f32 1.0, %v1081
    %v1083 = vmul.f32 %v1080, %v1082
    %v1084 = vadd.f32 %v1080, %v1083
    %vm1085 = vweird.f32 %v1076
    %vm1086 = vweird.f32 %v1080
    %vm1087 = vmor %vm1085, %vm1086
    %v1088 = vsel %vm1087, %v1080, %v1084
    %v1089 = vand.u32 2147483647, %v1076
    %vm1090 = vcmp.eq.f32.partialorder %v1089, 8.507059e+37
    %v1091 = vand.u32 %v1076, 2147483648
    %v1092 = vor.u32 1.1754944e-38, %v1091
    %v1093 = vsel %vm1090, %v1092, %v1088
    %v1094 = vrcp.pop %v1079
    %v1095 = vmul.f32 %v1079, %v1094
    %v1096 = vsub.f32 1.0, %v1095
    %v1097 = vmul.f32 %v1094, %v1096
    %v1098 = vadd.f32 %v1094, %v1097
    %vm1099 = vweird.f32 %v1079
    %vm1100 = vweird.f32 %v1094
    %vm1101 = vmor %vm1099, %vm1100
    %v1102 = vsel %vm1101, %v1094, %v1098
    %v1103 = vand.u32 2147483647, %v1079
    %vm1104 = vcmp.eq.f32.partialorder %v1103, 8.507059e+37
    %v1105 = vand.u32 %v1079, 2147483648
    %v1106 = vor.u32 1.1754944e-38, %v1105
    %v1107 = vsel %vm1104, %v1106, %v1102
    %v1108 = vmul.f32 %v1071, %v1093
    %v1109 = vmul.f32 %v1073, %v1107
    %1110 = vst.msk [vmem:[#allocation14] sm:$0xff] %vm232, %v1108
    %1111 = vst.msk [vmem:[#allocation14 + $0x8] sm:$0xff] %vm232, %v1109
    %v1113 = vsel %vm232, %v1108, 0
    %v1116 = vsel %vm232, %v1109, 0
    %1118 = vmatpush.msra.mxu0 0.0
    %1119 = vmatpush.msra.mxu0 0.0
    %1120 = vmatpush.msra.mxu0 0.0
    %1121 = vmatpush.msra.mxu0 0.0
    %1122 = vmatpush.msra.mxu0 0.0
    %1123 = vmatpush.msra.mxu0 0.0
    %1124 = vmatpush.msra.mxu0 0.0
    %1125 = vmatpush.msra.mxu0 0.0
    %1126 = vmatpush.msra.mxu0 0.0
    %1127 = vmatpush.msra.mxu0 0.0
    %1128 = vmatpush.msra.mxu0 0.0
    %1129 = vmatpush.msra.mxu0 0.0
    %1130 = vmatpush.msra.mxu0 0.0
    %1131 = vmatpush.msra.mxu0 0.0
    %1132 = vmatpush.msra.mxu0 %v1021
    %1133 = vmatpush.msra.mxu0 %v1018
    %1134 = vmatmul.f32.gmra.mxu0 %v1113
    %v1135 = vpop.f32.mrf.mxu0
    %v1136 = vadd.f32 0.0, %v1135
    %1137 = vmatmul.f32.gmra.mxu0 %v1116
    %v1138 = vpop.f32.mrf.mxu0
    %v1139 = vadd.f32 0.0, %v1138
    %1140 = vdwg.mxu0
    %v1142 = vsel %vm232, %v1136, 0
    %v1145 = vsel %vm232, %v1139, 0
    %1147 = vmatpush.msra.mxu0 0.0
    %1148 = vmatpush.msra.mxu0 0.0
    %1149 = vmatpush.msra.mxu0 0.0
    %1150 = vmatpush.msra.mxu0 0.0
    %1151 = vmatpush.msra.mxu0 0.0
    %1152 = vmatpush.msra.mxu0 0.0
    %1153 = vmatpush.msra.mxu0 0.0
    %1154 = vmatpush.msra.mxu0 0.0
    %1155 = vmatpush.msra.mxu0 0.0
    %1156 = vmatpush.msra.mxu0 0.0
    %1157 = vmatpush.msra.mxu0 0.0
    %1158 = vmatpush.msra.mxu0 0.0
    %1159 = vmatpush.msra.mxu0 0.0
    %1160 = vmatpush.msra.mxu0 0.0
    %1161 = vmatpush.msra.mxu0 %v932
    %1162 = vmatpush.msra.mxu0 %v931
    %1163 = vmatmul.f32.gmra.mxu0 %v1142
    %v1164 = vpop.f32.mrf.mxu0
    %v1165 = vadd.f32 0.0, %v1164
    %1166 = vmatmul.f32.gmra.mxu0 %v1145
    %v1167 = vpop.f32.mrf.mxu0
    %v1168 = vadd.f32 0.0, %v1167
    %1169 = vdwg.mxu0
    %v1170 = vadd.f32 %v913, %v1165
    %v1171 = vadd.f32 %v914, %v1168
    %1172 = vrot.lane.b32.xlu0 %v965, 112
    %v1173 = vpop.permute.xlu0 %1172
    %1174 = vrot.lane.b32.xlu0 %v968, 112
    %v1175 = vpop.permute.xlu0 %1174
    %1176 = vrot.lane.b32.xlu0 %v995, 112
    %v1177 = vpop.permute.xlu0 %1176
    %1178 = vrot.lane.b32.xlu0 %v998, 112
    %v1179 = vpop.permute.xlu0 %1178
    %v1180 = vsel %vm232, %v1173, 0
    %v1182 = vsel %vm232, %v1175, 0
    %v1184 = vsel %vm232, %v1177, 0
    %v1186 = vsel %vm232, %v1179, 0
    %1188 = vmatpush.xpose.msra.mxu0 0.0
    %1189 = vmatpush.xpose.msra.mxu0 0.0
    %1190 = vmatpush.xpose.msra.mxu0 0.0
    %1191 = vmatpush.xpose.msra.mxu0 0.0
    %1192 = vmatpush.xpose.msra.mxu0 0.0
    %1193 = vmatpush.xpose.msra.mxu0 0.0
    %1194 = vmatpush.xpose.msra.mxu0 0.0
    %1195 = vmatpush.xpose.msra.mxu0 0.0
    %1196 = vmatpush.xpose.msra.mxu0 0.0
    %1197 = vmatpush.xpose.msra.mxu0 0.0
    %1198 = vmatpush.xpose.msra.mxu0 0.0
    %1199 = vmatpush.xpose.msra.mxu0 0.0
    %1200 = vmatpush.xpose.msra.mxu0 0.0
    %1201 = vmatpush.xpose.msra.mxu0 0.0
    %1202 = vmatpush.xpose.msra.mxu0 %v1186
    %1203 = vmatpush.xpose.msra.mxu0 %v1184
    %1204 = vmatmul.f32.gmra.mxu0 %v1180
    %v1205 = vpop.f32.mrf.mxu0
    %v1206 = vadd.f32 0.0, %v1205
    %1207 = vmatmul.f32.gmra.mxu0 %v1182
    %v1208 = vpop.f32.mrf.mxu0
    %v1209 = vadd.f32 0.0, %v1208
    %1210 = vdwg.mxu0
    %v1211 = vmul.f32 %v1206, 0.25
    %v1212 = vmul.f32 %v1209, 0.25
    %v1213 = vadd.f32 %v1211, %v939
    %v1214 = vadd.f32 %v1212, %v940
    %v1215 = vsel %vm232, %v1213, -inf
    %1216 = vmax.xlane.f32.xlu0 %v1215
    %v1217 = vpop.xlane.xlu0 %1216
    %v1218 = vsel %vm232, %v1214, -inf
    %1219 = vmax.xlane.f32.xlu0 %v1218
    %v1220 = vpop.xlane.xlu0 %1219
    %v1221 = vsub.f32 %v1213, %v1217
    %v1222 = vsub.f32 %v1214, %v1220
    %v1223 = vmul.f32 %v1221, 1.442695
    %v1224 = vpow.pop %v1223
    %v1225 = vmul.f32 %v1222, 1.442695
    %v1226 = vpow.pop %v1225
    %v1227 = vsel %vm232, %v1224, 0.0
    %1228 = vadd.xlane.f32.xlu0 %v1227
    %v1229 = vpop.xlane.xlu0 %1228
    %v1230 = vsel %vm232, %v1226, 0.0
    %1231 = vadd.xlane.f32.xlu0 %v1230
    %v1232 = vpop.xlane.xlu0 %1231
    %v1233 = vrcp.pop %v1229
    %v1234 = vmul.f32 %v1229, %v1233
    %v1235 = vsub.f32 1.0, %v1234
    %v1236 = vmul.f32 %v1233, %v1235
    %v1237 = vadd.f32 %v1233, %v1236
    %vm1238 = vweird.f32 %v1229
    %vm1239 = vweird.f32 %v1233
    %vm1240 = vmor %vm1238, %vm1239
    %v1241 = vsel %vm1240, %v1233, %v1237
    %v1242 = vand.u32 2147483647, %v1229
    %vm1243 = vcmp.eq.f32.partialorder %v1242, 8.507059e+37
    %v1244 = vand.u32 %v1229, 2147483648
    %v1245 = vor.u32 1.1754944e-38, %v1244
    %v1246 = vsel %vm1243, %v1245, %v1241
    %v1247 = vrcp.pop %v1232
    %v1248 = vmul.f32 %v1232, %v1247
    %v1249 = vsub.f32 1.0, %v1248
    %v1250 = vmul.f32 %v1247, %v1249
    %v1251 = vadd.f32 %v1247, %v1250
    %vm1252 = vweird.f32 %v1232
    %vm1253 = vweird.f32 %v1247
    %vm1254 = vmor %vm1252, %vm1253
    %v1255 = vsel %vm1254, %v1247, %v1251
    %v1256 = vand.u32 2147483647, %v1232
    %vm1257 = vcmp.eq.f32.partialorder %v1256, 8.507059e+37
    %v1258 = vand.u32 %v1232, 2147483648
    %v1259 = vor.u32 1.1754944e-38, %v1258
    %v1260 = vsel %vm1257, %v1259, %v1255
    %v1261 = vmul.f32 %v1224, %v1246
    %v1262 = vmul.f32 %v1226, %v1260
    %s1263 = scalar_lea.vmem [#allocation14], 16
    %1264 = vst.msk [vmem:[%s1263] sm:$0xff] %vm232, %v1261
    %1265 = vst.msk [vmem:[%s1263 + $0x8] sm:$0xff] %vm232, %v1262
    %1268 = vrot.lane.b32.xlu0 %v1018, 112
    %v1269 = vpop.permute.xlu0 %1268
    %1270 = vrot.lane.b32.xlu0 %v1021, 112
    %v1271 = vpop.permute.xlu0 %1270
    %v1275 = vsel %vm232, %v1261, 0
    %v1278 = vsel %vm232, %v1262, 0
    %1280 = vmatpush.msra.mxu0 0.0
    %1281 = vmatpush.msra.mxu0 0.0
    %1282 = vmatpush.msra.mxu0 0.0
    %1283 = vmatpush.msra.mxu0 0.0
    %1284 = vmatpush.msra.mxu0 0.0
    %1285 = vmatpush.msra.mxu0 0.0
    %1286 = vmatpush.msra.mxu0 0.0
    %1287 = vmatpush.msra.mxu0 0.0
    %1288 = vmatpush.msra.mxu0 0.0
    %1289 = vmatpush.msra.mxu0 0.0
    %1290 = vmatpush.msra.mxu0 0.0
    %1291 = vmatpush.msra.mxu0 0.0
    %1292 = vmatpush.msra.mxu0 0.0
    %1293 = vmatpush.msra.mxu0 0.0
    %1294 = vmatpush.msra.mxu0 %v1271
    %1295 = vmatpush.msra.mxu0 %v1269
    %1296 = vmatmul.f32.gmra.mxu0 %v1275
    %v1297 = vpop.f32.mrf.mxu0
    %v1298 = vadd.f32 0.0, %v1297
    %1299 = vmatmul.f32.gmra.mxu0 %v1278
    %v1300 = vpop.f32.mrf.mxu0
    %v1301 = vadd.f32 0.0, %v1300
    %1302 = vdwg.mxu0
    %v1304 = vsel %vm232, %v1298, 0
    %v1307 = vsel %vm232, %v1301, 0
    %1309 = vmatpush.msra.mxu0 0.0
    %1310 = vmatpush.msra.mxu0 0.0
    %1311 = vmatpush.msra.mxu0 0.0
    %1312 = vmatpush.msra.mxu0 0.0
    %1313 = vmatpush.msra.mxu0 0.0
    %1314 = vmatpush.msra.mxu0 0.0
    %1315 = vmatpush.msra.mxu0 0.0
    %1316 = vmatpush.msra.mxu0 0.0
    %1317 = vmatpush.msra.mxu0 0.0
    %1318 = vmatpush.msra.mxu0 0.0
    %1319 = vmatpush.msra.mxu0 0.0
    %1320 = vmatpush.msra.mxu0 0.0
    %1321 = vmatpush.msra.mxu0 0.0
    %1322 = vmatpush.msra.mxu0 0.0
    %1323 = vmatpush.msra.mxu0 %v934
    %1324 = vmatpush.msra.mxu0 %v933
    %1325 = vmatmul.f32.gmra.mxu0 %v1304
    %v1326 = vpop.f32.mrf.mxu0
    %v1327 = vadd.f32 0.0, %v1326
    %1328 = vmatmul.f32.gmra.mxu0 %v1307
    %v1329 = vpop.f32.mrf.mxu0
    %v1330 = vadd.f32 0.0, %v1329
    %1331 = vdwg.mxu0
    %v1332 = vadd.f32 %v1170, %v1327
    %v1333 = vadd.f32 %v1171, %v1330
    %1334 = vrot.lane.b32.xlu0 %v965, 96
    %v1335 = vpop.permute.xlu0 %1334
    %1336 = vrot.lane.b32.xlu0 %v968, 96
    %v1337 = vpop.permute.xlu0 %1336
    %1338 = vrot.lane.b32.xlu0 %v995, 96
    %v1339 = vpop.permute.xlu0 %1338
    %1340 = vrot.lane.b32.xlu0 %v998, 96
    %v1341 = vpop.permute.xlu0 %1340
    %v1342 = vsel %vm232, %v1335, 0
    %v1344 = vsel %vm232, %v1337, 0
    %v1346 = vsel %vm232, %v1339, 0
    %v1348 = vsel %vm232, %v1341, 0
    %1350 = vmatpush.xpose.msra.mxu0 0.0
    %1351 = vmatpush.xpose.msra.mxu0 0.0
    %1352 = vmatpush.xpose.msra.mxu0 0.0
    %1353 = vmatpush.xpose.msra.mxu0 0.0
    %1354 = vmatpush.xpose.msra.mxu0 0.0
    %1355 = vmatpush.xpose.msra.mxu0 0.0
    %1356 = vmatpush.xpose.msra.mxu0 0.0
    %1357 = vmatpush.xpose.msra.mxu0 0.0
    %1358 = vmatpush.xpose.msra.mxu0 0.0
    %1359 = vmatpush.xpose.msra.mxu0 0.0
    %1360 = vmatpush.xpose.msra.mxu0 0.0
    %1361 = vmatpush.xpose.msra.mxu0 0.0
    %1362 = vmatpush.xpose.msra.mxu0 0.0
    %1363 = vmatpush.xpose.msra.mxu0 0.0
    %1364 = vmatpush.xpose.msra.mxu0 %v1348
    %1365 = vmatpush.xpose.msra.mxu0 %v1346
    %1366 = vmatmul.f32.gmra.mxu0 %v1342
    %v1367 = vpop.f32.mrf.mxu0
    %v1368 = vadd.f32 0.0, %v1367
    %1369 = vmatmul.f32.gmra.mxu0 %v1344
    %v1370 = vpop.f32.mrf.mxu0
    %v1371 = vadd.f32 0.0, %v1370
    %1372 = vdwg.mxu0
    %v1373 = vmul.f32 %v1368, 0.25
    %v1374 = vmul.f32 %v1371, 0.25
    %v1375 = vadd.f32 %v1373, %v939
    %v1376 = vadd.f32 %v1374, %v940
    %v1377 = vsel %vm232, %v1375, -inf
    %1378 = vmax.xlane.f32.xlu0 %v1377
    %v1379 = vpop.xlane.xlu0 %1378
    %v1380 = vsel %vm232, %v1376, -inf
    %1381 = vmax.xlane.f32.xlu0 %v1380
    %v1382 = vpop.xlane.xlu0 %1381
    %v1383 = vsub.f32 %v1375, %v1379
    %v1384 = vsub.f32 %v1376, %v1382
    %v1385 = vmul.f32 %v1383, 1.442695
    %v1386 = vpow.pop %v1385
    %v1387 = vmul.f32 %v1384, 1.442695
    %v1388 = vpow.pop %v1387
    %v1389 = vsel %vm232, %v1386, 0.0
    %1390 = vadd.xlane.f32.xlu0 %v1389
    %v1391 = vpop.xlane.xlu0 %1390
    %v1392 = vsel %vm232, %v1388, 0.0
    %1393 = vadd.xlane.f32.xlu0 %v1392
    %v1394 = vpop.xlane.xlu0 %1393
    %v1395 = vrcp.pop %v1391
    %v1396 = vmul.f32 %v1391, %v1395
    %v1397 = vsub.f32 1.0, %v1396
    %v1398 = vmul.f32 %v1395, %v1397
    %v1399 = vadd.f32 %v1395, %v1398
    %vm1400 = vweird.f32 %v1391
    %vm1401 = vweird.f32 %v1395
    %vm1402 = vmor %vm1400, %vm1401
    %v1403 = vsel %vm1402, %v1395, %v1399
    %v1404 = vand.u32 2147483647, %v1391
    %vm1405 = vcmp.eq.f32.partialorder %v1404, 8.507059e+37
    %v1406 = vand.u32 %v1391, 2147483648
    %v1407 = vor.u32 1.1754944e-38, %v1406
    %v1408 = vsel %vm1405, %v1407, %v1403
    %v1409 = vrcp.pop %v1394
    %v1410 = vmul.f32 %v1394, %v1409
    %v1411 = vsub.f32 1.0, %v1410
    %v1412 = vmul.f32 %v1409, %v1411
    %v1413 = vadd.f32 %v1409, %v1412
    %vm1414 = vweird.f32 %v1394
    %vm1415 = vweird.f32 %v1409
    %vm1416 = vmor %vm1414, %vm1415
    %v1417 = vsel %vm1416, %v1409, %v1413
    %v1418 = vand.u32 2147483647, %v1394
    %vm1419 = vcmp.eq.f32.partialorder %v1418, 8.507059e+37
    %v1420 = vand.u32 %v1394, 2147483648
    %v1421 = vor.u32 1.1754944e-38, %v1420
    %v1422 = vsel %vm1419, %v1421, %v1417
    %v1423 = vmul.f32 %v1386, %v1408
    %v1424 = vmul.f32 %v1388, %v1422
    %s1425 = scalar_lea.vmem [#allocation14], 32
    %1426 = vst.msk [vmem:[%s1425] sm:$0xff] %vm232, %v1423
    %1427 = vst.msk [vmem:[%s1425 + $0x8] sm:$0xff] %vm232, %v1424
    %1428 = vrot.lane.b32.xlu0 %v1018, 96
    %v1429 = vpop.permute.xlu0 %1428
    %1430 = vrot.lane.b32.xlu0 %v1021, 96
    %v1431 = vpop.permute.xlu0 %1430
    %v1435 = vsel %vm232, %v1423, 0
    %v1438 = vsel %vm232, %v1424, 0
    %1440 = vmatpush.msra.mxu0 0.0
    %1441 = vmatpush.msra.mxu0 0.0
    %1442 = vmatpush.msra.mxu0 0.0
    %1443 = vmatpush.msra.mxu0 0.0
    %1444 = vmatpush.msra.mxu0 0.0
    %1445 = vmatpush.msra.mxu0 0.0
    %1446 = vmatpush.msra.mxu0 0.0
    %1447 = vmatpush.msra.mxu0 0.0
    %1448 = vmatpush.msra.mxu0 0.0
    %1449 = vmatpush.msra.mxu0 0.0
    %1450 = vmatpush.msra.mxu0 0.0
    %1451 = vmatpush.msra.mxu0 0.0
    %1452 = vmatpush.msra.mxu0 0.0
    %1453 = vmatpush.msra.mxu0 0.0
    %1454 = vmatpush.msra.mxu0 %v1431
    %1455 = vmatpush.msra.mxu0 %v1429
    %1456 = vmatmul.f32.gmra.mxu0 %v1435
    %v1457 = vpop.f32.mrf.mxu0
    %v1458 = vadd.f32 0.0, %v1457
    %1459 = vmatmul.f32.gmra.mxu0 %v1438
    %v1460 = vpop.f32.mrf.mxu0
    %v1461 = vadd.f32 0.0, %v1460
    %1462 = vdwg.mxu0
    %v1464 = vsel %vm232, %v1458, 0
    %v1467 = vsel %vm232, %v1461, 0
    %1469 = vmatpush.msra.mxu0 0.0
    %1470 = vmatpush.msra.mxu0 0.0
    %1471 = vmatpush.msra.mxu0 0.0
    %1472 = vmatpush.msra.mxu0 0.0
    %1473 = vmatpush.msra.mxu0 0.0
    %1474 = vmatpush.msra.mxu0 0.0
    %1475 = vmatpush.msra.mxu0 0.0
    %1476 = vmatpush.msra.mxu0 0.0
    %1477 = vmatpush.msra.mxu0 0.0
    %1478 = vmatpush.msra.mxu0 0.0
    %1479 = vmatpush.msra.mxu0 0.0
    %1480 = vmatpush.msra.mxu0 0.0
    %1481 = vmatpush.msra.mxu0 0.0
    %1482 = vmatpush.msra.mxu0 0.0
    %1483 = vmatpush.msra.mxu0 %v936
    %1484 = vmatpush.msra.mxu0 %v935
    %1485 = vmatmul.f32.gmra.mxu0 %v1464
    %v1486 = vpop.f32.mrf.mxu0
    %v1487 = vadd.f32 0.0, %v1486
    %1488 = vmatmul.f32.gmra.mxu0 %v1467
    %v1489 = vpop.f32.mrf.mxu0
    %v1490 = vadd.f32 0.0, %v1489
    %1491 = vdwg.mxu0
    %v1492 = vadd.f32 %v1332, %v1487
    %v1493 = vadd.f32 %v1333, %v1490
    %1494 = vrot.lane.b32.xlu0 %v965, 80
    %v1495 = vpop.permute.xlu0 %1494
    %1496 = vrot.lane.b32.xlu0 %v968, 80
    %v1497 = vpop.permute.xlu0 %1496
    %1498 = vrot.lane.b32.xlu0 %v995, 80
    %v1499 = vpop.permute.xlu0 %1498
    %1500 = vrot.lane.b32.xlu0 %v998, 80
    %v1501 = vpop.permute.xlu0 %1500
    %v1502 = vsel %vm232, %v1495, 0
    %v1504 = vsel %vm232, %v1497, 0
    %v1506 = vsel %vm232, %v1499, 0
    %v1508 = vsel %vm232, %v1501, 0
    %1510 = vmatpush.xpose.msra.mxu0 0.0
    %1511 = vmatpush.xpose.msra.mxu0 0.0
    %1512 = vmatpush.xpose.msra.mxu0 0.0
    %1513 = vmatpush.xpose.msra.mxu0 0.0
    %1514 = vmatpush.xpose.msra.mxu0 0.0
    %1515 = vmatpush.xpose.msra.mxu0 0.0
    %1516 = vmatpush.xpose.msra.mxu0 0.0
    %1517 = vmatpush.xpose.msra.mxu0 0.0
    %1518 = vmatpush.xpose.msra.mxu0 0.0
    %1519 = vmatpush.xpose.msra.mxu0 0.0
    %1520 = vmatpush.xpose.msra.mxu0 0.0
    %1521 = vmatpush.xpose.msra.mxu0 0.0
    %1522 = vmatpush.xpose.msra.mxu0 0.0
    %1523 = vmatpush.xpose.msra.mxu0 0.0
    %1524 = vmatpush.xpose.msra.mxu0 %v1508
    %1525 = vmatpush.xpose.msra.mxu0 %v1506
    %1526 = vmatmul.f32.gmra.mxu0 %v1502
    %v1527 = vpop.f32.mrf.mxu0
    %v1528 = vadd.f32 0.0, %v1527
    %1529 = vmatmul.f32.gmra.mxu0 %v1504
    %v1530 = vpop.f32.mrf.mxu0
    %v1531 = vadd.f32 0.0, %v1530
    %1532 = vdwg.mxu0
    %v1533 = vmul.f32 %v1528, 0.25
    %v1534 = vmul.f32 %v1531, 0.25
    %v1535 = vadd.f32 %v1533, %v939
    %v1536 = vadd.f32 %v1534, %v940
    %v1537 = vsel %vm232, %v1535, -inf
    %1538 = vmax.xlane.f32.xlu0 %v1537
    %v1539 = vpop.xlane.xlu0 %1538
    %v1540 = vsel %vm232, %v1536, -inf
    %1541 = vmax.xlane.f32.xlu0 %v1540
    %v1542 = vpop.xlane.xlu0 %1541
    %v1543 = vsub.f32 %v1535, %v1539
    %v1544 = vsub.f32 %v1536, %v1542
    %v1545 = vmul.f32 %v1543, 1.442695
    %v1546 = vpow.pop %v1545
    %v1547 = vmul.f32 %v1544, 1.442695
    %v1548 = vpow.pop %v1547
    %v1549 = vsel %vm232, %v1546, 0.0
    %1550 = vadd.xlane.f32.xlu0 %v1549
    %v1551 = vpop.xlane.xlu0 %1550
    %v1552 = vsel %vm232, %v1548, 0.0
    %1553 = vadd.xlane.f32.xlu0 %v1552
    %v1554 = vpop.xlane.xlu0 %1553
    %v1555 = vrcp.pop %v1551
    %v1556 = vmul.f32 %v1551, %v1555
    %v1557 = vsub.f32 1.0, %v1556
    %v1558 = vmul.f32 %v1555, %v1557
    %v1559 = vadd.f32 %v1555, %v1558
    %vm1560 = vweird.f32 %v1551
    %vm1561 = vweird.f32 %v1555
    %vm1562 = vmor %vm1560, %vm1561
    %v1563 = vsel %vm1562, %v1555, %v1559
    %v1564 = vand.u32 2147483647, %v1551
    %vm1565 = vcmp.eq.f32.partialorder %v1564, 8.507059e+37
    %v1566 = vand.u32 %v1551, 2147483648
    %v1567 = vor.u32 1.1754944e-38, %v1566
    %v1568 = vsel %vm1565, %v1567, %v1563
    %v1569 = vrcp.pop %v1554
    %v1570 = vmul.f32 %v1554, %v1569
    %v1571 = vsub.f32 1.0, %v1570
    %v1572 = vmul.f32 %v1569, %v1571
    %v1573 = vadd.f32 %v1569, %v1572
    %vm1574 = vweird.f32 %v1554
    %vm1575 = vweird.f32 %v1569
    %vm1576 = vmor %vm1574, %vm1575
    %v1577 = vsel %vm1576, %v1569, %v1573
    %v1578 = vand.u32 2147483647, %v1554
    %vm1579 = vcmp.eq.f32.partialorder %v1578, 8.507059e+37
    %v1580 = vand.u32 %v1554, 2147483648
    %v1581 = vor.u32 1.1754944e-38, %v1580
    %v1582 = vsel %vm1579, %v1581, %v1577
    %v1583 = vmul.f32 %v1546, %v1568
    %v1584 = vmul.f32 %v1548, %v1582
    %s1585 = scalar_lea.vmem [#allocation14], 48
    %1586 = vst.msk [vmem:[%s1585] sm:$0xff] %vm232, %v1583
    %1587 = vst.msk [vmem:[%s1585 + $0x8] sm:$0xff] %vm232, %v1584
    %1588 = vrot.lane.b32.xlu0 %v1018, 80
    %v1589 = vpop.permute.xlu0 %1588
    %1590 = vrot.lane.b32.xlu0 %v1021, 80
    %v1591 = vpop.permute.xlu0 %1590
    %v1595 = vsel %vm232, %v1583, 0
    %v1598 = vsel %vm232, %v1584, 0
    %1600 = vmatpush.msra.mxu0 0.0
    %1601 = vmatpush.msra.mxu0 0.0
    %1602 = vmatpush.msra.mxu0 0.0
    %1603 = vmatpush.msra.mxu0 0.0
    %1604 = vmatpush.msra.mxu0 0.0
    %1605 = vmatpush.msra.mxu0 0.0
    %1606 = vmatpush.msra.mxu0 0.0
    %1607 = vmatpush.msra.mxu0 0.0
    %1608 = vmatpush.msra.mxu0 0.0
    %1609 = vmatpush.msra.mxu0 0.0
    %1610 = vmatpush.msra.mxu0 0.0
    %1611 = vmatpush.msra.mxu0 0.0
    %1612 = vmatpush.msra.mxu0 0.0
    %1613 = vmatpush.msra.mxu0 0.0
    %1614 = vmatpush.msra.mxu0 %v1591
    %1615 = vmatpush.msra.mxu0 %v1589
    %1616 = vmatmul.f32.gmra.mxu0 %v1595
    %v1617 = vpop.f32.mrf.mxu0
    %v1618 = vadd.f32 0.0, %v1617
    %1619 = vmatmul.f32.gmra.mxu0 %v1598
    %v1620 = vpop.f32.mrf.mxu0
    %v1621 = vadd.f32 0.0, %v1620
    %1622 = vdwg.mxu0
    %v1624 = vsel %vm232, %v1618, 0
    %v1627 = vsel %vm232, %v1621, 0
    %1629 = vmatpush.msra.mxu0 0.0
    %1630 = vmatpush.msra.mxu0 0.0
    %1631 = vmatpush.msra.mxu0 0.0
    %1632 = vmatpush.msra.mxu0 0.0
    %1633 = vmatpush.msra.mxu0 0.0
    %1634 = vmatpush.msra.mxu0 0.0
    %1635 = vmatpush.msra.mxu0 0.0
    %1636 = vmatpush.msra.mxu0 0.0
    %1637 = vmatpush.msra.mxu0 0.0
    %1638 = vmatpush.msra.mxu0 0.0
    %1639 = vmatpush.msra.mxu0 0.0
    %1640 = vmatpush.msra.mxu0 0.0
    %1641 = vmatpush.msra.mxu0 0.0
    %1642 = vmatpush.msra.mxu0 0.0
    %1643 = vmatpush.msra.mxu0 %v938
    %1644 = vmatpush.msra.mxu0 %v937
    %1645 = vmatmul.f32.gmra.mxu0 %v1624
    %v1646 = vpop.f32.mrf.mxu0
    %v1647 = vadd.f32 0.0, %v1646
    %1648 = vmatmul.f32.gmra.mxu0 %v1627
    %v1649 = vpop.f32.mrf.mxu0
    %v1650 = vadd.f32 0.0, %v1649
    %1651 = vdwg.mxu0
    %v1652 = vadd.f32 %v1492, %v1647
    %v1653 = vadd.f32 %v1493, %v1650
    %v1654 = vsel %vm156, %v1652, 0.0
    %1655 = vadd.xlane.f32.xlu0 %v1654
    %v1656 = vpop.xlane.xlu0 %1655
    %v1657 = vsel %vm156, %v1653, 0.0
    %1658 = vadd.xlane.f32.xlu0 %v1657
    %v1659 = vpop.xlane.xlu0 %1658
    %v1660 = vmul.f32 %v1656, %v876
    %v1661 = vmul.f32 %v1659, %v876
    %v1662 = vsub.f32 %v1652, %v1660
    %v1663 = vsub.f32 %v1653, %v1661
    %v1664 = vmul.f32 %v1662, %v1662
    %v1665 = vmul.f32 %v1663, %v1663
    %v1666 = vsel %vm156, %v1664, 0.0
    %1667 = vadd.xlane.f32.xlu0 %v1666
    %v1668 = vpop.xlane.xlu0 %1667
    %v1669 = vsel %vm156, %v1665, 0.0
    %1670 = vadd.xlane.f32.xlu0 %v1669
    %v1671 = vpop.xlane.xlu0 %1670
    %v1672 = vmul.f32 %v1668, %v876
    %v1673 = vmul.f32 %v1671, %v876
    %v1674 = vadd.f32 %v1672, 1e-05
    %v1675 = vadd.f32 %v1673, 1e-05
    %v1676 = vrsqrt.pop %v1674
    %v1677 = vmul.f32 %v1676, %v1674
    %v1678 = vmul.f32 %v1677, %v1676
    %v1679 = vmul.f32 0.5, %v1678
    %v1680 = vsub.f32 1.5, %v1679
    %v1681 = vmul.f32 %v1676, %v1680
    %vm1682 = vweird.f32 %v1674
    %vm1683 = vweird.f32 %v1676
    %vm1684 = vmor %vm1682, %vm1683
    %v1685 = vsel %vm1684, %v1676, %v1681
    %v1686 = vrsqrt.pop %v1675
    %v1687 = vmul.f32 %v1686, %v1675
    %v1688 = vmul.f32 %v1687, %v1686
    %v1689 = vmul.f32 0.5, %v1688
    %v1690 = vsub.f32 1.5, %v1689
    %v1691 = vmul.f32 %v1686, %v1690
    %vm1692 = vweird.f32 %v1675
    %vm1693 = vweird.f32 %v1686
    %vm1694 = vmor %vm1692, %vm1693
    %v1695 = vsel %vm1694, %v1686, %v1691
    %v1696 = vmul.f32 %v1662, %v1685
    %v1697 = vmul.f32 %v1663, %v1695
    %v1698 = vld [vmem:[#allocation10] sm:$0xff]
    %v1699 = vld [vmem:[#allocation10 + $0x8] sm:$0xff]
    %v1700 = vld [vmem:[#allocation10 + $0x10] sm:$0xff]
    %v1701 = vld [vmem:[#allocation10 + $0x18] sm:$0xff]
    %v1703 = vsel %vm156, %v1696, 0
    %v1706 = vsel %vm156, %v1697, 0
    %1708 = vmatpush.msra.mxu0 0.0
    %1709 = vmatpush.msra.mxu0 0.0
    %1710 = vmatpush.msra.mxu0 0.0
    %1711 = vmatpush.msra.mxu0 0.0
    %1712 = vmatpush.msra.mxu0 0.0
    %1713 = vmatpush.msra.mxu0 0.0
    %1714 = vmatpush.msra.mxu0 0.0
    %1715 = vmatpush.msra.mxu0 0.0
    %1716 = vmatpush.msra.mxu0 0.0
    %1717 = vmatpush.msra.mxu0 0.0
    %1718 = vmatpush.msra.mxu0 0.0
    %1719 = vmatpush.msra.mxu0 0.0
    %1720 = vmatpush.msra.mxu0 %v1701
    %1721 = vmatpush.msra.mxu0 %v1700
    %1722 = vmatpush.msra.mxu0 %v1699
    %1723 = vmatpush.msra.mxu0 %v1698
    %1724 = vmatmul.f32.gmra.mxu0 %v1703
    %v1725 = vpop.f32.mrf.mxu0
    %v1726 = vadd.f32 0.0, %v1725
    %1727 = vmatmul.f32.gmra.mxu0 %v1706
    %v1728 = vpop.f32.mrf.mxu0
    %v1729 = vadd.f32 0.0, %v1728
    %1730 = vdwg.mxu0
    %v1731 = vmax.f32 %v1726, 0.0
    %v1732 = vmax.f32 %v1729, 0.0
    %v1733 = vld [vmem:[%s13] sm:$0xff]
    %v1734 = vld [vmem:[%s13 + $0x8] sm:$0xff]
    %v1735 = vld [vmem:[%s13 + $0x10] sm:$0xff]
    %v1736 = vld [vmem:[%s13 + $0x18] sm:$0xff]
    %v1737 = vld [vmem:[%s13 + $0x20] sm:$0xff]
    %v1738 = vld [vmem:[%s13 + $0x28] sm:$0xff]
    %v1739 = vld [vmem:[%s13 + $0x30] sm:$0xff]
    %v1740 = vld [vmem:[%s13 + $0x38] sm:$0xff]
    %vm1741 = vcmask 523264
    %v1743 = vsel %vm1741, %v1731, 0
    %v1746 = vsel %vm1741, %v1732, 0
    %1748 = vmatpush.msra.mxu0 0.0
    %1749 = vmatpush.msra.mxu0 0.0
    %1750 = vmatpush.msra.mxu0 0.0
    %1751 = vmatpush.msra.mxu0 0.0
    %1752 = vmatpush.msra.mxu0 0.0
    %1753 = vmatpush.msra.mxu0 0.0
    %1754 = vmatpush.msra.mxu0 0.0
    %1755 = vmatpush.msra.mxu0 0.0
    %1756 = vmatpush.msra.mxu0 %v1740
    %1757 = vmatpush.msra.mxu0 %v1739
    %1758 = vmatpush.msra.mxu0 %v1738
    %1759 = vmatpush.msra.mxu0 %v1737
    %1760 = vmatpush.msra.mxu0 %v1736
    %1761 = vmatpush.msra.mxu0 %v1735
    %1762 = vmatpush.msra.mxu0 %v1734
    %1763 = vmatpush.msra.mxu0 %v1733
    %1764 = vmatmul.f32.gmra.mxu0 %v1743
    %v1765 = vpop.f32.mrf.mxu0
    %v1766 = vadd.f32 %v1696, %v1765
    %1767 = vmatmul.f32.gmra.mxu0 %v1746
    %v1768 = vpop.f32.mrf.mxu0
    %v1769 = vadd.f32 %v1697, %v1768
    %1770 = vdwg.mxu0
    %v1771 = vsel %vm156, %v1766, 0.0
    %1772 = vadd.xlane.f32.xlu0 %v1771
    %v1773 = vpop.xlane.xlu0 %1772
    %v1774 = vsel %vm156, %v1769, 0.0
    %1775 = vadd.xlane.f32.xlu0 %v1774
    %v1776 = vpop.xlane.xlu0 %1775
    %v1777 = vmul.f32 %v1773, %v876
    %v1778 = vmul.f32 %v1776, %v876
    %v1779 = vsub.f32 %v1766, %v1777
    %v1780 = vsub.f32 %v1769, %v1778
    %v1781 = vmul.f32 %v1779, %v1779
    %v1782 = vmul.f32 %v1780, %v1780
    %v1783 = vsel %vm156, %v1781, 0.0
    %1784 = vadd.xlane.f32.xlu0 %v1783
    %v1785 = vpop.xlane.xlu0 %1784
    %v1786 = vsel %vm156, %v1782, 0.0
    %1787 = vadd.xlane.f32.xlu0 %v1786
    %v1788 = vpop.xlane.xlu0 %1787
    %v1789 = vmul.f32 %v1785, %v876
    %v1790 = vmul.f32 %v1788, %v876
    %v1791 = vadd.f32 %v1789, 1e-05
    %v1792 = vadd.f32 %v1790, 1e-05
    %v1793 = vrsqrt.pop %v1791
    %v1794 = vmul.f32 %v1793, %v1791
    %v1795 = vmul.f32 %v1794, %v1793
    %v1796 = vmul.f32 0.5, %v1795
    %v1797 = vsub.f32 1.5, %v1796
    %v1798 = vmul.f32 %v1793, %v1797
    %vm1799 = vweird.f32 %v1791
    %vm1800 = vweird.f32 %v1793
    %vm1801 = vmor %vm1799, %vm1800
    %v1802 = vsel %vm1801, %v1793, %v1798
    %v1803 = vrsqrt.pop %v1792
    %v1804 = vmul.f32 %v1803, %v1792
    %v1805 = vmul.f32 %v1804, %v1803
    %v1806 = vmul.f32 0.5, %v1805
    %v1807 = vsub.f32 1.5, %v1806
    %v1808 = vmul.f32 %v1803, %v1807
    %vm1809 = vweird.f32 %v1792
    %vm1810 = vweird.f32 %v1803
    %vm1811 = vmor %vm1809, %vm1810
    %v1812 = vsel %vm1811, %v1803, %v1808
    %v1813 = vmul.f32 %v1779, %v1802
    %v1814 = vmul.f32 %v1780, %v1812
    %1815 = vst.msk [vmem:[#allocation11] sm:$0xff] %vm156, %v1813
    %1816 = vst.msk [vmem:[#allocation11 + $0x8] sm:$0xff] %vm156, %v1814
    // Predicated region
    $region78: #{tpu_custom_call.1} parent=1 // pred_check
      _
    $region79: #{tpu_custom_call.1} parent=1 // pred_check_branch
      %1818 = sbr.rel (0) target = $region81
    $region80: #{tpu_custom_call.1} parent=1 // pred_region
      %1820 = vsyncadd [#allocation4], 0
      %s1821 = sshll.u32 [#allocation11], 4
      %s1822 = int_to_ptr.vmem [resolvable:$true] %s1821
      %s1823 = sshll.u32 %s14, 4
      %s1824 = int_to_ptr.hbm [resolvable:$true] %s1823
      %1829 = dma.vmem_to_hbm [thread:$0]  %s1822, 256, %s1824, [#allocation4], 128, 128, 8
    $region81: #{tpu_custom_call.1} parent=1 // pred_fallthru
      _
    // Predicated region
    $region82: #{tpu_custom_call.1} parent=1 // pred_check
      _
    $region83: #{tpu_custom_call.1} parent=1 // pred_check_branch
      %1831 = sbr.rel (0) target = $region85
    $region84: #{tpu_custom_call.1} parent=1 // pred_region
      %1833 = vsyncadd [#allocation13], 0
      %s1834 = sshll.u32 [#allocation12], 4
      %s1835 = int_to_ptr.vmem [resolvable:$true] %s1834
      %s1836 = sshll.u32 %s15, 4
      %s1837 = int_to_ptr.hbm [resolvable:$true] %s1836
      %1842 = dma.vmem_to_hbm [thread:$0]  %s1835, 1024, %s1837, [#allocation13], 128, 128, 8
    $region85: #{tpu_custom_call.1} parent=1 // pred_fallthru
      _
    // Predicated region
    $region86: #{tpu_custom_call.1} parent=1 // pred_check
      _
    $region87: #{tpu_custom_call.1} parent=1 // pred_check_branch
      %1844 = sbr.rel (0) target = $region89
    $region88: #{tpu_custom_call.1} parent=1 // pred_region
      %1846 = vsyncadd [#allocation13], 0
      %s1847 = sshll.u32 [#allocation14], 4
      %s1848 = int_to_ptr.vmem [resolvable:$true] %s1847
      %s1849 = sshll.u32 %s16, 4
      %s1850 = int_to_ptr.hbm [resolvable:$true] %s1849
      %1855 = dma.vmem_to_hbm [thread:$0]  %s1848, 1024, %s1850, [#allocation13], 128, 128, 8
    $region89: #{tpu_custom_call.1} parent=1 // pred_fallthru
      _
    // Predicated region
    $region90: #{tpu_custom_call.1} parent=1 // pred_check
      _
    $region91: #{tpu_custom_call.1} parent=1 // pred_check_branch
      %1857 = sbr.rel (0) target = $region93
    $region92: #{tpu_custom_call.1} parent=1 // pred_region
      %1859 = dma.done [#allocation4], 256
    $region93: #{tpu_custom_call.1} parent=1 // pred_fallthru
      _
    // Predicated region
    $region94: #{tpu_custom_call.1} parent=1 // pred_check
      _
    $region95: #{tpu_custom_call.1} parent=1 // pred_check_branch
      %1861 = sbr.rel (0) target = $region97
    $region96: #{tpu_custom_call.1} parent=1 // pred_region
      %1863 = dma.done [#allocation13], 1024
    $region97: #{tpu_custom_call.1} parent=1 // pred_fallthru
      _
    // Predicated region
    $region98: #{tpu_custom_call.1} parent=1 // pred_check
      _
    $region99: #{tpu_custom_call.1} parent=1 // pred_check_branch
      %1865 = sbr.rel (0) target = $region101
    $region100: #{tpu_custom_call.1} parent=1 // pred_region
      %1867 = dma.done [#allocation13], 1024
    $region101: #{tpu_custom_call.1} parent=1 // pred_fallthru
      _
    %1868 = vsyncpa [#allocation3], 1
    %1869 = vsyncpa [#allocation6], 1
    %1870 = vsyncpa [#allocation9], 1
    %1871 = vsyncpa [#allocation4], 1
    %1872 = vsyncpa [#allocation13], 1

</llo_original>
